<compile_context>
chip_gen: v6e
topology: v6e:2x2x1
jax: 0.10.0
libtpu: 0.0.40
codegen_flags: <defaults>
</compile_context>

<pallas_src>
import functools

import jax
import jax.numpy as jnp
from jax.experimental import pallas as pl
from jax.experimental.pallas import tpu as pltpu

H = 64          # hidden size
D_IN = 11       # LSTM input size
GATES = ("i", "f", "o", "g")   # packed gate-group order: sigmoid gates, then tanh

# MXU operand dtype. float32 keeps the 1e-5 numerical check exact on all chips.
# TODO(synk): set to jnp.bfloat16 on v6e/v7x for single-pass MXU matmuls on the
#             serial chain (loosen the allclose tolerance to ~2e-2).
MXU_DTYPE = jnp.float32


# ---------------------------------------------------------------------------
# Pallas kernel
# ---------------------------------------------------------------------------
def dementia_kernel(x_ref, wih0_ref, bint_ref, wfused_ref, wfc_ref, bfc_ref,
                    out_ref, *, Bp, T):
    """Packed-weight layout (each 2H=128-lane gate group is [cell0 | cell1],
    cell0 = layer-0 cell at time t+1, cell1 = layer-1 cell at time t):
       x_ref   : ((T+1)*Bp, D_IN)  time-major, batch padded to Bp, last
                                   timestep is a zero dummy for the epilogue
       wih0    : (D_IN, 8H)  layer-0 input weights in cell0 lanes, 0 in cell1
       bint    : (1, 8H)     b_ih0+b_hh0 in cell0 lanes, b_ih1+b_hh1 in cell1
       wfused  : (2H, 8H)    rows 0:H act on h0, rows H:2H act on h1;
                             cell0 lanes = [whh0; 0], cell1 lanes = [wih1; whh1]
       wfc     : (1, 2H)     [0 | w_fc]   bfc : (1, 1)
       out_ref : (Bp, 1)
    """
    # ---- hoisted input projection + all biases (off the serial chain) -----
    gfull = (jnp.dot(x_ref[...], wih0_ref[...],
                     preferred_element_type=jnp.float32)
             + bint_ref[...])                                 # ((T+1)*Bp, 8H)

    wfused = wfused_ref[...].astype(MXU_DTYPE)                # (2H, 8H)

    def packed_cell(gates8, cp):
        # gates8 lanes: [i0 i1 | f0 f1 | o0 o1 | g0 g1]; every slice below is
        # 128-lane aligned, so no mid-vreg lane shuffles on the serial chain.
        sg = jax.nn.sigmoid(gates8[:, :6 * H])                # one EUP stream
        gt = jnp.tanh(gates8[:, 6 * H:])                      # one EUP stream
        c_new = sg[:, 2 * H:4 * H] * cp + sg[:, 0:2 * H] * gt
        h_new = sg[:, 4 * H:6 * H] * jnp.tanh(c_new)
        return h_new, c_new

    # ---- prologue: layer-0 cell at t=0 (h,c init are zero, no matmul) ------
    lane = jax.lax.broadcasted_iota(jnp.int32, (1, 2 * H), 1)
    mask_cell0 = (lane < H).astype(jnp.float32)               # 1 on layer-0 lanes
    g0 = gfull[0:Bp, :]
    sg = jax.nn.sigmoid(g0[:, :6 * H])
    gt = jnp.tanh(g0[:, 6 * H:])
    cp = sg[:, 0:2 * H] * gt * mask_cell0                     # c = i*g, cell1 zeroed
    hp = sg[:, 4 * H:6 * H] * jnp.tanh(cp)                    # cell1 lanes stay 0
    # hp = [h0(0) | h1(-1)=0],  cp = [c0(0) | c1(-1)=0]

    # ---- wavefront: step s does layer-0(t=s) and layer-1(t=s-1) together ---
    # T is small and static -> fully unrolled; ONE dependent matmul per step.
    for s in range(1, T + 1):
        gates8 = (jnp.dot(hp.astype(MXU_DTYPE), wfused,
                          preferred_element_type=jnp.float32)
                  + gfull[s * Bp:(s + 1) * Bp, :])            # tile-aligned slice
        hp, cp = packed_cell(gates8, cp)
    # after s=T:  hp = [h0(T) (dummy, discarded) | h1(T-1)]

    # ---- final Linear(64, 1) + sigmoid: VPU multiply + lane reduction ------
    logits = jnp.sum(hp * wfc_ref[...], axis=-1, keepdims=True) + bfc_ref[...]
    out_ref[...] = jax.nn.sigmoid(logits)


def dementia_forward(x, p):
    """x: (B, T, D_IN) float32, p: packed params (see pack_params)."""
    B, T, _ = x.shape
    Bp = max(8, ((B + 7) // 8) * 8)                  # pad batch to sublane tile
    # Time-major, batch-padded, plus one zero dummy timestep for the epilogue.
    x_tm = jnp.transpose(x, (1, 0, 2))                       # (T, B, D_IN)
    x_tm = jnp.pad(x_tm, ((0, 1), (0, Bp - B), (0, 0)))      # (T+1, Bp, D_IN)
    x_flat = x_tm.reshape((T + 1) * Bp, D_IN)

    args = (x_flat, p["wih0"], p["bint"], p["wfused"], p["wfc"], p["bfc"])
    kernel = functools.partial(dementia_kernel, Bp=Bp, T=T)
    out = pl.pallas_call(
        kernel,
        out_shape=jax.ShapeDtypeStruct((Bp, 1), jnp.float32),
        in_specs=[pl.BlockSpec(memory_space=pltpu.MemorySpace.VMEM)] * len(args),
        out_specs=pl.BlockSpec(memory_space=pltpu.MemorySpace.VMEM),
    )(*args)
    return out[:B]


# ---------------------------------------------------------------------------
# Parameter construction (PyTorch-layout init + repack for the kernel)
# ---------------------------------------------------------------------------
def init_torch_params(key):
    """PyTorch-layout weights, uniform(-1/sqrt(H), 1/sqrt(H))."""
    ks = jax.random.split(key, 10)
    s = 1.0 / jnp.sqrt(jnp.float32(H))

    def u(k, shape):
        return jax.random.uniform(k, shape, jnp.float32, -s, s)

    return dict(
        w_ih_l0=u(ks[0], (4 * H, D_IN)), w_hh_l0=u(ks[1], (4 * H, H)),
        b_ih_l0=u(ks[2], (4 * H,)),      b_hh_l0=u(ks[3], (4 * H,)),
        w_ih_l1=u(ks[4], (4 * H, H)),    w_hh_l1=u(ks[5], (4 * H, H)),
        b_ih_l1=u(ks[6], (4 * H,)),      b_hh_l1=u(ks[7], (4 * H,)),
        w_fc=u(ks[8], (1, H)),           b_fc=u(ks[9], (1,)),
    )


def _split_gates(w):
    """Split a PyTorch gate-stacked tensor (4H, ...) / (4H,) into per-gate
    pieces. PyTorch gate order along the stacked axis is (i, f, g, o)."""
    return {"i": w[0 * H:1 * H], "f": w[1 * H:2 * H],
            "g": w[2 * H:3 * H], "o": w[3 * H:4 * H]}


def pack_params(tp):
    """Repack PyTorch LSTM params into the wavefront-fused kernel layout."""
    zeros_dh = jnp.zeros((D_IN, H), jnp.float32)
    zeros_hh = jnp.zeros((H, H), jnp.float32)

    wih0 = _split_gates(tp["w_ih_l0"])   # each (H, D_IN)
    whh0 = _split_gates(tp["w_hh_l0"])   # each (H, H)
    wih1 = _split_gates(tp["w_ih_l1"])   # each (H, H)
    whh1 = _split_gates(tp["w_hh_l1"])   # each (H, H)
    b0 = _split_gates(tp["b_ih_l0"] + tp["b_hh_l0"])   # each (H,)
    b1 = _split_gates(tp["b_ih_l1"] + tp["b_hh_l1"])   # each (H,)

    # Hoisted input projection: layer-0 weights in cell0 lanes, zeros in cell1.
    wih0_int = jnp.concatenate(
        [jnp.concatenate([wih0[g].T, zeros_dh], axis=1) for g in GATES],
        axis=1)                                                  # (D_IN, 8H)
    # Summed biases: layer-0 bias in cell0 lanes, layer-1 bias in cell1 lanes.
    b_int = jnp.concatenate(
        [jnp.concatenate([b0[g], b1[g]]) for g in GATES]).reshape(1, 8 * H)
    # Fused recurrence weights: rows 0:H act on h0, rows H:2H act on h1.
    w_fused = jnp.concatenate(
        [jnp.concatenate(
            [jnp.concatenate([whh0[g].T, zeros_hh], axis=0),     # cell0 cols
             jnp.concatenate([wih1[g].T, whh1[g].T], axis=0)],   # cell1 cols
            axis=1) for g in GATES],
        axis=1)                                                  # (2H, 8H)
    # FC weight aligned to the cell1 (layer-1 h) lanes of the packed state.
    wfc = jnp.concatenate([jnp.zeros((1, H), jnp.float32),
                           tp["w_fc"].reshape(1, H)], axis=1)    # (1, 2H)
    bfc = tp["b_fc"].reshape(1, 1)
    return dict(wih0=wih0_int, bint=b_int, wfused=w_fused, wfc=wfc, bfc=bfc)


# ---------------------------------------------------------------------------
# Pure-JAX reference with PyTorch semantics (gate order i, f, g, o)
# ---------------------------------------------------------------------------
def reference_forward(x, tp):
    B, T, _ = x.shape

    def cell(xt, h, c, w_ih, w_hh, b_ih, b_hh):
        gates = xt @ w_ih.T + h @ w_hh.T + b_ih + b_hh
        i = jax.nn.sigmoid(gates[:, 0 * H:1 * H])
        f = jax.nn.sigmoid(gates[:, 1 * H:2 * H])
        g = jnp.tanh(gates[:, 2 * H:3 * H])
        o = jax.nn.sigmoid(gates[:, 3 * H:4 * H])
        c_new = f * c + i * g
        return o * jnp.tanh(c_new), c_new

    h0 = jnp.zeros((B, H)); c0 = jnp.zeros((B, H))
    h1 = jnp.zeros((B, H)); c1 = jnp.zeros((B, H))
    for t in range(T):
        h0, c0 = cell(x[:, t, :], h0, c0,
                      tp["w_ih_l0"], tp["w_hh_l0"], tp["b_ih_l0"], tp["b_hh_l0"])
        h1, c1 = cell(h0, h1, c1,
                      tp["w_ih_l1"], tp["w_hh_l1"], tp["b_ih_l1"], tp["b_hh_l1"])
    return jax.nn.sigmoid(h1 @ tp["w_fc"].T + tp["b_fc"])


if __name__ == "__main__":
    key = jax.random.PRNGKey(0)
    k_x, k_p = jax.random.split(key)

    B, T = 2, 8
    x = jax.random.normal(k_x, (B, T, D_IN), jnp.float32)

    torch_params = init_torch_params(k_p)
    params = pack_params(torch_params)

    out = dementia_forward(x, params)
    out = jax.block_until_ready(out)

    ref = reference_forward(x, torch_params)
    assert out.shape == (B, 1)
    assert jnp.allclose(out, ref, atol=1e-5, rtol=1e-5), (out, ref)

    print("KERNEL_OK")
</pallas_src>

<mosaic_0001>
module attributes {stable_mosaic.version = 11 : i64} {
  func.func @dementia_kernel(%arg0: memref<72x11xf32, #tpu.memory_space<vmem>>, %arg1: memref<11x512xf32, #tpu.memory_space<vmem>>, %arg2: memref<1x512xf32, #tpu.memory_space<vmem>>, %arg3: memref<128x512xf32, #tpu.memory_space<vmem>>, %arg4: memref<1x128xf32, #tpu.memory_space<vmem>>, %arg5: memref<1x1xf32, #tpu.memory_space<vmem>>, %arg6: memref<8x1xf32, #tpu.memory_space<vmem>>) attributes {dimension_semantics = [], scalar_prefetch = 0 : i64, scratch_operands = 0 : i64, tpu.core_type = #tpu.core_type<tc>} {
    %c0 = arith.constant 0 : index
    %c0_0 = arith.constant 0 : index
    %0 = vector.load %arg0[%c0, %c0_0] : memref<72x11xf32, #tpu.memory_space<vmem>>, vector<72x11xf32>
    %c0_1 = arith.constant 0 : index
    %c0_2 = arith.constant 0 : index
    %1 = vector.load %arg1[%c0_1, %c0_2] : memref<11x512xf32, #tpu.memory_space<vmem>>, vector<11x512xf32>
    %cst = arith.constant dense<0.000000e+00> : vector<72x512xf32>
    %2 = tpu.matmul %0, %1, %cst {dimension_numbers = #tpu.dot_dimension_numbers<[1], [0], [0], [1], [0, 0, 1, 1], [], []>} : vector<72x11xf32>, vector<11x512xf32>, vector<72x512xf32> -> vector<72x512xf32>
    %c0_3 = arith.constant 0 : index
    %c0_4 = arith.constant 0 : index
    %3 = vector.load %arg2[%c0_3, %c0_4] : memref<1x512xf32, #tpu.memory_space<vmem>>, vector<1x512xf32>
    %4 = vector.broadcast %3 : vector<1x512xf32> to vector<72x512xf32>
    %5 = arith.addf %2, %4 : vector<72x512xf32>
    %c0_5 = arith.constant 0 : index
    %c0_6 = arith.constant 0 : index
    %6 = vector.load %arg3[%c0_5, %c0_6] : memref<128x512xf32, #tpu.memory_space<vmem>>, vector<128x512xf32>
    %7 = tpu.iota {dimensions = array<i32: 1>} : vector<1x128xi32>
    %c64_i32 = arith.constant 64 : i32
    %8 = vector.broadcast %c64_i32 : i32 to vector<1x128xi32>
    %9 = arith.cmpi slt, %7, %8 : vector<1x128xi32>
    %10 = arith.extui %9 : vector<1x128xi1> to vector<1x128xi32>
    %11 = arith.sitofp %10 : vector<1x128xi32> to vector<1x128xf32>
    %12 = vector.extract_strided_slice %5 {offsets = [0, 0], sizes = [8, 512], strides = [1, 1]} : vector<72x512xf32> to vector<8x512xf32>
    %13 = vector.extract_strided_slice %12 {offsets = [0, 0], sizes = [8, 384], strides = [1, 1]} : vector<8x512xf32> to vector<8x384xf32>
    %14 = arith.negf %13 : vector<8x384xf32>
    %15 = math.exp %14 : vector<8x384xf32>
    %cst_7 = arith.constant 1.000000e+00 : f32
    %16 = vector.broadcast %cst_7 : f32 to vector<8x384xf32>
    %17 = arith.addf %16, %15 : vector<8x384xf32>
    %18 = arith.divf %16, %17 : vector<8x384xf32>
    %19 = vector.extract_strided_slice %12 {offsets = [0, 384], sizes = [8, 128], strides = [1, 1]} : vector<8x512xf32> to vector<8x128xf32>
    %20 = math.tanh %19 : vector<8x128xf32>
    %21 = vector.extract_strided_slice %18 {offsets = [0, 0], sizes = [8, 128], strides = [1, 1]} : vector<8x384xf32> to vector<8x128xf32>
    %22 = arith.mulf %21, %20 : vector<8x128xf32>
    %23 = vector.broadcast %11 : vector<1x128xf32> to vector<8x128xf32>
    %24 = arith.mulf %22, %23 : vector<8x128xf32>
    %25 = vector.extract_strided_slice %18 {offsets = [0, 256], sizes = [8, 128], strides = [1, 1]} : vector<8x384xf32> to vector<8x128xf32>
    %26 = math.tanh %24 : vector<8x128xf32>
    %27 = arith.mulf %25, %26 : vector<8x128xf32>
    %cst_8 = arith.constant dense<0.000000e+00> : vector<8x512xf32>
    %28 = tpu.matmul %27, %6, %cst_8 {dimension_numbers = #tpu.dot_dimension_numbers<[1], [0], [0], [1], [0, 0, 1, 1], [], []>} : vector<8x128xf32>, vector<128x512xf32>, vector<8x512xf32> -> vector<8x512xf32>
    %29 = vector.extract_strided_slice %5 {offsets = [8, 0], sizes = [8, 512], strides = [1, 1]} : vector<72x512xf32> to vector<8x512xf32>
    %30 = arith.addf %28, %29 : vector<8x512xf32>
    %31 = vector.extract_strided_slice %30 {offsets = [0, 0], sizes = [8, 384], strides = [1, 1]} : vector<8x512xf32> to vector<8x384xf32>
    %32 = arith.negf %31 : vector<8x384xf32>
    %33 = math.exp %32 : vector<8x384xf32>
    %cst_9 = arith.constant 1.000000e+00 : f32
    %34 = vector.broadcast %cst_9 : f32 to vector<8x384xf32>
    %35 = arith.addf %34, %33 : vector<8x384xf32>
    %36 = arith.divf %34, %35 : vector<8x384xf32>
    %37 = vector.extract_strided_slice %30 {offsets = [0, 384], sizes = [8, 128], strides = [1, 1]} : vector<8x512xf32> to vector<8x128xf32>
    %38 = math.tanh %37 : vector<8x128xf32>
    %39 = vector.extract_strided_slice %36 {offsets = [0, 128], sizes = [8, 128], strides = [1, 1]} : vector<8x384xf32> to vector<8x128xf32>
    %40 = arith.mulf %39, %24 : vector<8x128xf32>
    %41 = vector.extract_strided_slice %36 {offsets = [0, 0], sizes = [8, 128], strides = [1, 1]} : vector<8x384xf32> to vector<8x128xf32>
    %42 = arith.mulf %41, %38 : vector<8x128xf32>
    %43 = arith.addf %40, %42 : vector<8x128xf32>
    %44 = vector.extract_strided_slice %36 {offsets = [0, 256], sizes = [8, 128], strides = [1, 1]} : vector<8x384xf32> to vector<8x128xf32>
    %45 = math.tanh %43 : vector<8x128xf32>
    %46 = arith.mulf %44, %45 : vector<8x128xf32>
    %cst_10 = arith.constant dense<0.000000e+00> : vector<8x512xf32>
    %47 = tpu.matmul %46, %6, %cst_10 {dimension_numbers = #tpu.dot_dimension_numbers<[1], [0], [0], [1], [0, 0, 1, 1], [], []>} : vector<8x128xf32>, vector<128x512xf32>, vector<8x512xf32> -> vector<8x512xf32>
    %48 = vector.extract_strided_slice %5 {offsets = [16, 0], sizes = [8, 512], strides = [1, 1]} : vector<72x512xf32> to vector<8x512xf32>
    %49 = arith.addf %47, %48 : vector<8x512xf32>
    %50 = vector.extract_strided_slice %49 {offsets = [0, 0], sizes = [8, 384], strides = [1, 1]} : vector<8x512xf32> to vector<8x384xf32>
    %51 = arith.negf %50 : vector<8x384xf32>
    %52 = math.exp %51 : vector<8x384xf32>
    %cst_11 = arith.constant 1.000000e+00 : f32
    %53 = vector.broadcast %cst_11 : f32 to vector<8x384xf32>
    %54 = arith.addf %53, %52 : vector<8x384xf32>
    %55 = arith.divf %53, %54 : vector<8x384xf32>
    %56 = vector.extract_strided_slice %49 {offsets = [0, 384], sizes = [8, 128], strides = [1, 1]} : vector<8x512xf32> to vector<8x128xf32>
    %57 = math.tanh %56 : vector<8x128xf32>
    %58 = vector.extract_strided_slice %55 {offsets = [0, 128], sizes = [8, 128], strides = [1, 1]} : vector<8x384xf32> to vector<8x128xf32>
    %59 = arith.mulf %58, %43 : vector<8x128xf32>
    %60 = vector.extract_strided_slice %55 {offsets = [0, 0], sizes = [8, 128], strides = [1, 1]} : vector<8x384xf32> to vector<8x128xf32>
    %61 = arith.mulf %60, %57 : vector<8x128xf32>
    %62 = arith.addf %59, %61 : vector<8x128xf32>
    %63 = vector.extract_strided_slice %55 {offsets = [0, 256], sizes = [8, 128], strides = [1, 1]} : vector<8x384xf32> to vector<8x128xf32>
    %64 = math.tanh %62 : vector<8x128xf32>
    %65 = arith.mulf %63, %64 : vector<8x128xf32>
    %cst_12 = arith.constant dense<0.000000e+00> : vector<8x512xf32>
    %66 = tpu.matmul %65, %6, %cst_12 {dimension_numbers = #tpu.dot_dimension_numbers<[1], [0], [0], [1], [0, 0, 1, 1], [], []>} : vector<8x128xf32>, vector<128x512xf32>, vector<8x512xf32> -> vector<8x512xf32>
    %67 = vector.extract_strided_slice %5 {offsets = [24, 0], sizes = [8, 512], strides = [1, 1]} : vector<72x512xf32> to vector<8x512xf32>
    %68 = arith.addf %66, %67 : vector<8x512xf32>
    %69 = vector.extract_strided_slice %68 {offsets = [0, 0], sizes = [8, 384], strides = [1, 1]} : vector<8x512xf32> to vector<8x384xf32>
    %70 = arith.negf %69 : vector<8x384xf32>
    %71 = math.exp %70 : vector<8x384xf32>
    %cst_13 = arith.constant 1.000000e+00 : f32
    %72 = vector.broadcast %cst_13 : f32 to vector<8x384xf32>
    %73 = arith.addf %72, %71 : vector<8x384xf32>
    %74 = arith.divf %72, %73 : vector<8x384xf32>
    %75 = vector.extract_strided_slice %68 {offsets = [0, 384], sizes = [8, 128], strides = [1, 1]} : vector<8x512xf32> to vector<8x128xf32>
    %76 = math.tanh %75 : vector<8x128xf32>
    %77 = vector.extract_strided_slice %74 {offsets = [0, 128], sizes = [8, 128], strides = [1, 1]} : vector<8x384xf32> to vector<8x128xf32>
    %78 = arith.mulf %77, %62 : vector<8x128xf32>
    %79 = vector.extract_strided_slice %74 {offsets = [0, 0], sizes = [8, 128], strides = [1, 1]} : vector<8x384xf32> to vector<8x128xf32>
    %80 = arith.mulf %79, %76 : vector<8x128xf32>
    %81 = arith.addf %78, %80 : vector<8x128xf32>
    %82 = vector.extract_strided_slice %74 {offsets = [0, 256], sizes = [8, 128], strides = [1, 1]} : vector<8x384xf32> to vector<8x128xf32>
    %83 = math.tanh %81 : vector<8x128xf32>
    %84 = arith.mulf %82, %83 : vector<8x128xf32>
    %cst_14 = arith.constant dense<0.000000e+00> : vector<8x512xf32>
    %85 = tpu.matmul %84, %6, %cst_14 {dimension_numbers = #tpu.dot_dimension_numbers<[1], [0], [0], [1], [0, 0, 1, 1], [], []>} : vector<8x128xf32>, vector<128x512xf32>, vector<8x512xf32> -> vector<8x512xf32>
    %86 = vector.extract_strided_slice %5 {offsets = [32, 0], sizes = [8, 512], strides = [1, 1]} : vector<72x512xf32> to vector<8x512xf32>
    %87 = arith.addf %85, %86 : vector<8x512xf32>
    %88 = vector.extract_strided_slice %87 {offsets = [0, 0], sizes = [8, 384], strides = [1, 1]} : vector<8x512xf32> to vector<8x384xf32>
    %89 = arith.negf %88 : vector<8x384xf32>
    %90 = math.exp %89 : vector<8x384xf32>
    %cst_15 = arith.constant 1.000000e+00 : f32
    %91 = vector.broadcast %cst_15 : f32 to vector<8x384xf32>
    %92 = arith.addf %91, %90 : vector<8x384xf32>
    %93 = arith.divf %91, %92 : vector<8x384xf32>
    %94 = vector.extract_strided_slice %87 {offsets = [0, 384], sizes = [8, 128], strides = [1, 1]} : vector<8x512xf32> to vector<8x128xf32>
    %95 = math.tanh %94 : vector<8x128xf32>
    %96 = vector.extract_strided_slice %93 {offsets = [0, 128], sizes = [8, 128], strides = [1, 1]} : vector<8x384xf32> to vector<8x128xf32>
    %97 = arith.mulf %96, %81 : vector<8x128xf32>
    %98 = vector.extract_strided_slice %93 {offsets = [0, 0], sizes = [8, 128], strides = [1, 1]} : vector<8x384xf32> to vector<8x128xf32>
    %99 = arith.mulf %98, %95 : vector<8x128xf32>
    %100 = arith.addf %97, %99 : vector<8x128xf32>
    %101 = vector.extract_strided_slice %93 {offsets = [0, 256], sizes = [8, 128], strides = [1, 1]} : vector<8x384xf32> to vector<8x128xf32>
    %102 = math.tanh %100 : vector<8x128xf32>
    %103 = arith.mulf %101, %102 : vector<8x128xf32>
    %cst_16 = arith.constant dense<0.000000e+00> : vector<8x512xf32>
    %104 = tpu.matmul %103, %6, %cst_16 {dimension_numbers = #tpu.dot_dimension_numbers<[1], [0], [0], [1], [0, 0, 1, 1], [], []>} : vector<8x128xf32>, vector<128x512xf32>, vector<8x512xf32> -> vector<8x512xf32>
    %105 = vector.extract_strided_slice %5 {offsets = [40, 0], sizes = [8, 512], strides = [1, 1]} : vector<72x512xf32> to vector<8x512xf32>
    %106 = arith.addf %104, %105 : vector<8x512xf32>
    %107 = vector.extract_strided_slice %106 {offsets = [0, 0], sizes = [8, 384], strides = [1, 1]} : vector<8x512xf32> to vector<8x384xf32>
    %108 = arith.negf %107 : vector<8x384xf32>
    %109 = math.exp %108 : vector<8x384xf32>
    %cst_17 = arith.constant 1.000000e+00 : f32
    %110 = vector.broadcast %cst_17 : f32 to vector<8x384xf32>
    %111 = arith.addf %110, %109 : vector<8x384xf32>
    %112 = arith.divf %110, %111 : vector<8x384xf32>
    %113 = vector.extract_strided_slice %106 {offsets = [0, 384], sizes = [8, 128], strides = [1, 1]} : vector<8x512xf32> to vector<8x128xf32>
    %114 = math.tanh %113 : vector<8x128xf32>
    %115 = vector.extract_strided_slice %112 {offsets = [0, 128], sizes = [8, 128], strides = [1, 1]} : vector<8x384xf32> to vector<8x128xf32>
    %116 = arith.mulf %115, %100 : vector<8x128xf32>
    %117 = vector.extract_strided_slice %112 {offsets = [0, 0], sizes = [8, 128], strides = [1, 1]} : vector<8x384xf32> to vector<8x128xf32>
    %118 = arith.mulf %117, %114 : vector<8x128xf32>
    %119 = arith.addf %116, %118 : vector<8x128xf32>
    %120 = vector.extract_strided_slice %112 {offsets = [0, 256], sizes = [8, 128], strides = [1, 1]} : vector<8x384xf32> to vector<8x128xf32>
    %121 = math.tanh %119 : vector<8x128xf32>
    %122 = arith.mulf %120, %121 : vector<8x128xf32>
    %cst_18 = arith.constant dense<0.000000e+00> : vector<8x512xf32>
    %123 = tpu.matmul %122, %6, %cst_18 {dimension_numbers = #tpu.dot_dimension_numbers<[1], [0], [0], [1], [0, 0, 1, 1], [], []>} : vector<8x128xf32>, vector<128x512xf32>, vector<8x512xf32> -> vector<8x512xf32>
    %124 = vector.extract_strided_slice %5 {offsets = [48, 0], sizes = [8, 512], strides = [1, 1]} : vector<72x512xf32> to vector<8x512xf32>
    %125 = arith.addf %123, %124 : vector<8x512xf32>
    %126 = vector.extract_strided_slice %125 {offsets = [0, 0], sizes = [8, 384], strides = [1, 1]} : vector<8x512xf32> to vector<8x384xf32>
    %127 = arith.negf %126 : vector<8x384xf32>
    %128 = math.exp %127 : vector<8x384xf32>
    %cst_19 = arith.constant 1.000000e+00 : f32
    %129 = vector.broadcast %cst_19 : f32 to vector<8x384xf32>
    %130 = arith.addf %129, %128 : vector<8x384xf32>
    %131 = arith.divf %129, %130 : vector<8x384xf32>
    %132 = vector.extract_strided_slice %125 {offsets = [0, 384], sizes = [8, 128], strides = [1, 1]} : vector<8x512xf32> to vector<8x128xf32>
    %133 = math.tanh %132 : vector<8x128xf32>
    %134 = vector.extract_strided_slice %131 {offsets = [0, 128], sizes = [8, 128], strides = [1, 1]} : vector<8x384xf32> to vector<8x128xf32>
    %135 = arith.mulf %134, %119 : vector<8x128xf32>
    %136 = vector.extract_strided_slice %131 {offsets = [0, 0], sizes = [8, 128], strides = [1, 1]} : vector<8x384xf32> to vector<8x128xf32>
    %137 = arith.mulf %136, %133 : vector<8x128xf32>
    %138 = arith.addf %135, %137 : vector<8x128xf32>
    %139 = vector.extract_strided_slice %131 {offsets = [0, 256], sizes = [8, 128], strides = [1, 1]} : vector<8x384xf32> to vector<8x128xf32>
    %140 = math.tanh %138 : vector<8x128xf32>
    %141 = arith.mulf %139, %140 : vector<8x128xf32>
    %cst_20 = arith.constant dense<0.000000e+00> : vector<8x512xf32>
    %142 = tpu.matmul %141, %6, %cst_20 {dimension_numbers = #tpu.dot_dimension_numbers<[1], [0], [0], [1], [0, 0, 1, 1], [], []>} : vector<8x128xf32>, vector<128x512xf32>, vector<8x512xf32> -> vector<8x512xf32>
    %143 = vector.extract_strided_slice %5 {offsets = [56, 0], sizes = [8, 512], strides = [1, 1]} : vector<72x512xf32> to vector<8x512xf32>
    %144 = arith.addf %142, %143 : vector<8x512xf32>
    %145 = vector.extract_strided_slice %144 {offsets = [0, 0], sizes = [8, 384], strides = [1, 1]} : vector<8x512xf32> to vector<8x384xf32>
    %146 = arith.negf %145 : vector<8x384xf32>
    %147 = math.exp %146 : vector<8x384xf32>
    %cst_21 = arith.constant 1.000000e+00 : f32
    %148 = vector.broadcast %cst_21 : f32 to vector<8x384xf32>
    %149 = arith.addf %148, %147 : vector<8x384xf32>
    %150 = arith.divf %148, %149 : vector<8x384xf32>
    %151 = vector.extract_strided_slice %144 {offsets = [0, 384], sizes = [8, 128], strides = [1, 1]} : vector<8x512xf32> to vector<8x128xf32>
    %152 = math.tanh %151 : vector<8x128xf32>
    %153 = vector.extract_strided_slice %150 {offsets = [0, 128], sizes = [8, 128], strides = [1, 1]} : vector<8x384xf32> to vector<8x128xf32>
    %154 = arith.mulf %153, %138 : vector<8x128xf32>
    %155 = vector.extract_strided_slice %150 {offsets = [0, 0], sizes = [8, 128], strides = [1, 1]} : vector<8x384xf32> to vector<8x128xf32>
    %156 = arith.mulf %155, %152 : vector<8x128xf32>
    %157 = arith.addf %154, %156 : vector<8x128xf32>
    %158 = vector.extract_strided_slice %150 {offsets = [0, 256], sizes = [8, 128], strides = [1, 1]} : vector<8x384xf32> to vector<8x128xf32>
    %159 = math.tanh %157 : vector<8x128xf32>
    %160 = arith.mulf %158, %159 : vector<8x128xf32>
    %cst_22 = arith.constant dense<0.000000e+00> : vector<8x512xf32>
    %161 = tpu.matmul %160, %6, %cst_22 {dimension_numbers = #tpu.dot_dimension_numbers<[1], [0], [0], [1], [0, 0, 1, 1], [], []>} : vector<8x128xf32>, vector<128x512xf32>, vector<8x512xf32> -> vector<8x512xf32>
    %162 = vector.extract_strided_slice %5 {offsets = [64, 0], sizes = [8, 512], strides = [1, 1]} : vector<72x512xf32> to vector<8x512xf32>
    %163 = arith.addf %161, %162 : vector<8x512xf32>
    %164 = vector.extract_strided_slice %163 {offsets = [0, 0], sizes = [8, 384], strides = [1, 1]} : vector<8x512xf32> to vector<8x384xf32>
    %165 = arith.negf %164 : vector<8x384xf32>
    %166 = math.exp %165 : vector<8x384xf32>
    %cst_23 = arith.constant 1.000000e+00 : f32
    %167 = vector.broadcast %cst_23 : f32 to vector<8x384xf32>
    %168 = arith.addf %167, %166 : vector<8x384xf32>
    %169 = arith.divf %167, %168 : vector<8x384xf32>
    %170 = vector.extract_strided_slice %163 {offsets = [0, 384], sizes = [8, 128], strides = [1, 1]} : vector<8x512xf32> to vector<8x128xf32>
    %171 = math.tanh %170 : vector<8x128xf32>
    %172 = vector.extract_strided_slice %169 {offsets = [0, 128], sizes = [8, 128], strides = [1, 1]} : vector<8x384xf32> to vector<8x128xf32>
    %173 = arith.mulf %172, %157 : vector<8x128xf32>
    %174 = vector.extract_strided_slice %169 {offsets = [0, 0], sizes = [8, 128], strides = [1, 1]} : vector<8x384xf32> to vector<8x128xf32>
    %175 = arith.mulf %174, %171 : vector<8x128xf32>
    %176 = arith.addf %173, %175 : vector<8x128xf32>
    %177 = vector.extract_strided_slice %169 {offsets = [0, 256], sizes = [8, 128], strides = [1, 1]} : vector<8x384xf32> to vector<8x128xf32>
    %178 = math.tanh %176 : vector<8x128xf32>
    %179 = arith.mulf %177, %178 : vector<8x128xf32>
    %c0_24 = arith.constant 0 : index
    %c0_25 = arith.constant 0 : index
    %180 = vector.load %arg4[%c0_24, %c0_25] : memref<1x128xf32, #tpu.memory_space<vmem>>, vector<1x128xf32>
    %181 = vector.broadcast %180 : vector<1x128xf32> to vector<8x128xf32>
    %182 = arith.mulf %179, %181 : vector<8x128xf32>
    %cst_26 = arith.constant dense<0.000000e+00> : vector<8xf32>
    %183 = vector.multi_reduction <add>, %182, %cst_26 [1] : vector<8x128xf32> to vector<8xf32>
    %184 = vector.shape_cast %183 : vector<8xf32> to vector<8x1xf32>
    %c0_27 = arith.constant 0 : index
    %c0_28 = arith.constant 0 : index
    %185 = vector.load %arg5[%c0_27, %c0_28] : memref<1x1xf32, #tpu.memory_space<vmem>>, vector<1x1xf32>
    %186 = vector.broadcast %185 : vector<1x1xf32> to vector<8x1xf32>
    %187 = arith.addf %184, %186 : vector<8x1xf32>
    %188 = arith.negf %187 : vector<8x1xf32>
    %189 = math.exp %188 : vector<8x1xf32>
    %cst_29 = arith.constant 1.000000e+00 : f32
    %190 = vector.broadcast %cst_29 : f32 to vector<8x1xf32>
    %191 = arith.addf %190, %189 : vector<8x1xf32>
    %192 = arith.divf %190, %191 : vector<8x1xf32>
    %c0_30 = arith.constant 0 : index
    %c0_31 = arith.constant 0 : index
    %193 = vector.load %arg6[%c0_30, %c0_31] : memref<8x1xf32, #tpu.memory_space<vmem>>, vector<8x1xf32>
    tpu.vector_store %arg6[%c0_30, %c0_31], %192 {strides = array<i32>} : memref<8x1xf32, #tpu.memory_space<vmem>>, vector<8x1xf32>,
    return
  }
}

</mosaic_0001>

<llo_original>
// kernel: tpu_custom_call.1
$region0: #{tpu_custom_call.1}
  #allocation0 [shape = 'u32[]', space=smem, size = 0x4, offset = 0x4, fixed_abs, tag = 'smem constant byte address 0x4 - core index']
  #allocation1 [shape = 'u32[144,128]{1,0:T(1,128)}', space=vmem, size = 0x12000, scoped, tag = 'internal scratch']
  #allocation2 [shape = 'f32[1,1]{1,0:T(1,128)S(1)}', space=vmem, size = 0x200, scoped, tag = 'scoped memory for tpu_custom_call.1']
  %s0 = inlined_call_operand.vmem [shape: f32[72,11], index: 0, kind: input, shape index: {}]
  %s1 = inlined_call_operand.vmem [shape: f32[11,512], index: 1, kind: input, shape index: {}]
  %s2 = inlined_call_operand.vmem [shape: f32[1,512], index: 2, kind: input, shape index: {}]
  %s3 = inlined_call_operand.hbm [shape: f32[128,512], index: 3, kind: input, shape index: {}]
  %s4 = inlined_call_operand.vmem [shape: f32[1,128], index: 4, kind: input, shape index: {}]
  %s5 = inlined_call_operand.<no memory space> [shape: f32[1,1], index: 5, kind: input, shape index: {}]
  %s6 = inlined_call_operand.vmem [shape: f32[8,1], index: 6, kind: output, shape index: {}]
  %s7 = sld [smem:[#allocation0]]
  $region38: #{tpu_custom_call.1} parent=0
    _
  %s9 = ssub.s32 1, %s7
  %s10 = scalar_select 0, %s9, %s7
  %v11 = vstv %s5
  %12 = vst [vmem:[#allocation2] sm:$0x1] %v11
  $region1: #{tpu_custom_call.1} parent=0
    #allocation3 [shape = 'u8[262144]{0}', space=vmem, size = 0x40000, scoped, tag = 'input window, operand 3, single buffered']
    #allocation4 [shape = 's32[1]{0}', space=sflag, size = 0x4, scoped, tag = 'scoped memory for tpu_custom_call.1']
    %13 = vsyncpa [#allocation4], 0
    // Predicated region
    $region2: #{tpu_custom_call.1} parent=1 // pred_check
      _
    $region3: #{tpu_custom_call.1} parent=1 // pred_check_branch
      %15 = sbr.rel (0) target = $region5
    $region4: #{tpu_custom_call.1} parent=1 // pred_region
      _
    $region5: #{tpu_custom_call.1} parent=1 // pred_fallthru
      _
    // Predicated region
    $region6: #{tpu_custom_call.1} parent=1 // pred_check
      _
    $region7: #{tpu_custom_call.1} parent=1 // pred_check_branch
      %17 = sbr.rel (0) target = $region9
    $region8: #{tpu_custom_call.1} parent=1 // pred_region
      _
    $region9: #{tpu_custom_call.1} parent=1 // pred_fallthru
      _
    // Predicated region
    $region10: #{tpu_custom_call.1} parent=1 // pred_check
      _
    $region11: #{tpu_custom_call.1} parent=1 // pred_check_branch
      %19 = sbr.rel (0) target = $region13
    $region12: #{tpu_custom_call.1} parent=1 // pred_region
      _
    $region13: #{tpu_custom_call.1} parent=1 // pred_fallthru
      _
    // Predicated region
    $region14: #{tpu_custom_call.1} parent=1 // pred_check
      _
    $region15: #{tpu_custom_call.1} parent=1 // pred_check_branch
      %21 = sbr.rel (0) target = $region17
    $region16: #{tpu_custom_call.1} parent=1 // pred_region
      %s23 = ssub.s32 8192, 8192
      %24 = vsyncadd [#allocation4], %s23
      %s25 = sshll.u32 [#allocation3], 4
      %s26 = int_to_ptr.vmem [resolvable:$true] %s25
      %31 = dma.hbm_to_vmem [thread:$0]  %s3, 8192, %s26, [#allocation4], 512, 512, 32
    $region17: #{tpu_custom_call.1} parent=1 // pred_fallthru
      _
    // Predicated region
    $region18: #{tpu_custom_call.1} parent=1 // pred_check
      _
    $region19: #{tpu_custom_call.1} parent=1 // pred_check_branch
      %33 = sbr.rel (0) target = $region21
    $region20: #{tpu_custom_call.1} parent=1 // pred_region
      _
    $region21: #{tpu_custom_call.1} parent=1 // pred_fallthru
      _
    // Predicated region
    $region22: #{tpu_custom_call.1} parent=1 // pred_check
      _
    $region23: #{tpu_custom_call.1} parent=1 // pred_check_branch
      %35 = sbr.rel (0) target = $region25
    $region24: #{tpu_custom_call.1} parent=1 // pred_region
      _
    $region25: #{tpu_custom_call.1} parent=1 // pred_fallthru
      _
    // Predicated region
    $region26: #{tpu_custom_call.1} parent=1 // pred_check
      _
    $region27: #{tpu_custom_call.1} parent=1 // pred_check_branch
      %37 = sbr.rel (0) target = $region29
    $region28: #{tpu_custom_call.1} parent=1 // pred_region
      %38 = dma.done [#allocation4], 8192
    $region29: #{tpu_custom_call.1} parent=1 // pred_fallthru
      _
    %v39 = vld [vmem:[%s0] sm:$0xff]
    %v40 = vld [vmem:[%s0 + $0x8] sm:$0xff]
    %v41 = vld [vmem:[%s0 + $0x10] sm:$0xff]
    %v42 = vld [vmem:[%s0 + $0x18] sm:$0xff]
    %v43 = vld [vmem:[%s0 + $0x20] sm:$0xff]
    %v44 = vld [vmem:[%s0 + $0x28] sm:$0xff]
    %v45 = vld [vmem:[%s0 + $0x30] sm:$0xff]
    %v46 = vld [vmem:[%s0 + $0x38] sm:$0xff]
    %v47 = vld [vmem:[%s0 + $0x40] sm:$0xff]
    %v48 = vld [vmem:[%s1] sm:$0xff]
    %v49 = vld [vmem:[%s1 + $0x8] sm:$0xff]
    %v50 = vld [vmem:[%s1 + $0x10] sm:$0xff]
    %v51 = vld [vmem:[%s1 + $0x18] sm:$0xff]
    %v52 = vld [vmem:[%s1 + $0x20] sm:$0x7]
    %v53 = vld [vmem:[%s1 + $0x28] sm:$0x7]
    %v54 = vld [vmem:[%s1 + $0x30] sm:$0x7]
    %v55 = vld [vmem:[%s1 + $0x38] sm:$0x7]
    %v56 = vld [vmem:[%s2] sm:$0xf]
    %v58 = vlaneseq
    %v59 = vshrl.u32 %v58, 7
    %v60 = vsub.s32 0, %v59
    %v61 = vrot.slane %v56, %v60
    %v62 = vlaneseq
    %v63 = vshrl.u32 %v62, 7
    %v64 = vsub.s32 1, %v63
    %v65 = vrot.slane %v56, %v64
    %v66 = vlaneseq
    %v67 = vshrl.u32 %v66, 7
    %v68 = vsub.s32 2, %v67
    %v69 = vrot.slane %v56, %v68
    %v70 = vlaneseq
    %v71 = vshrl.u32 %v70, 7
    %v72 = vsub.s32 3, %v71
    %v73 = vrot.slane %v56, %v72
    %vm78 = vcmask 89088
    %v80 = vsel %vm78, %v39, 0
    %v83 = vsel %vm78, %v40, 0
    %v86 = vsel %vm78, %v41, 0
    %v89 = vsel %vm78, %v42, 0
    %v92 = vsel %vm78, %v43, 0
    %v95 = vsel %vm78, %v44, 0
    %v98 = vsel %vm78, %v45, 0
    %v101 = vsel %vm78, %v46, 0
    %v104 = vsel %vm78, %v47, 0
    %vm106 = vcmask 1042432
    %v108 = vsel %vm106, %v52, 0
    %v111 = vsel %vm106, %v53, 0
    %v114 = vsel %vm106, %v54, 0
    %v117 = vsel %vm106, %v55, 0
    %119 = vmatprep.subr.mxu0 0.0
    %120 = vmatpush1.msra.mxu0 0.0
    %121 = vmatprep.subr.mxu0 0.0
    %122 = vmatpush1.msra.mxu0 0.0
    %123 = vmatprep.subr.mxu0 0.0
    %124 = vmatpush1.msra.mxu0 0.0
    %125 = vmatprep.subr.mxu0 0.0
    %126 = vmatpush1.msra.mxu0 0.0
    %127 = vmatprep.subr.mxu0 0.0
    %128 = vmatpush1.msra.mxu0 0.0
    %129 = vmatprep.subr.mxu0 0.0
    %130 = vmatpush1.msra.mxu0 0.0
    %131 = vmatprep.subr.mxu0 0.0
    %132 = vmatpush1.msra.mxu0 0.0
    %133 = vmatprep.subr.mxu0 0.0
    %134 = vmatpush1.msra.mxu0 0.0
    %135 = vmatprep.subr.mxu0 0.0
    %136 = vmatpush1.msra.mxu0 0.0
    %137 = vmatprep.subr.mxu0 0.0
    %138 = vmatpush1.msra.mxu0 0.0
    %139 = vmatprep.subr.mxu0 0.0
    %140 = vmatpush1.msra.mxu0 0.0
    %141 = vmatprep.subr.mxu0 0.0
    %142 = vmatpush1.msra.mxu0 0.0
    %143 = vmatprep.subr.mxu0 0.0
    %144 = vmatpush1.msra.mxu0 0.0
    %145 = vmatprep.subr.mxu0 0.0
    %146 = vmatpush1.msra.mxu0 0.0
    %147 = vmatprep.subr.mxu0 %v111
    %148 = vmatpush1.msra.mxu0 %v108
    %149 = vmatprep.subr.mxu0 %v49
    %150 = vmatpush1.msra.mxu0 %v48
    %151 = vmatprep.subr.mxu0 0.0
    %152 = vmatpush2.msra.mxu0 0.0
    %153 = vmatprep.subr.mxu0 0.0
    %154 = vmatpush2.msra.mxu0 0.0
    %155 = vmatprep.subr.mxu0 0.0
    %156 = vmatpush2.msra.mxu0 0.0
    %157 = vmatprep.subr.mxu0 0.0
    %158 = vmatpush2.msra.mxu0 0.0
    %159 = vmatprep.subr.mxu0 0.0
    %160 = vmatpush2.msra.mxu0 0.0
    %161 = vmatprep.subr.mxu0 0.0
    %162 = vmatpush2.msra.mxu0 0.0
    %163 = vmatprep.subr.mxu0 0.0
    %164 = vmatpush2.msra.mxu0 0.0
    %165 = vmatprep.subr.mxu0 0.0
    %166 = vmatpush2.msra.mxu0 0.0
    %167 = vmatprep.subr.mxu0 0.0
    %168 = vmatpush2.msra.mxu0 0.0
    %169 = vmatprep.subr.mxu0 0.0
    %170 = vmatpush2.msra.mxu0 0.0
    %171 = vmatprep.subr.mxu0 0.0
    %172 = vmatpush2.msra.mxu0 0.0
    %173 = vmatprep.subr.mxu0 0.0
    %174 = vmatpush2.msra.mxu0 0.0
    %175 = vmatprep.subr.mxu0 0.0
    %176 = vmatpush2.msra.mxu0 0.0
    %177 = vmatprep.subr.mxu0 0.0
    %178 = vmatpush2.msra.mxu0 0.0
    %179 = vmatprep.subr.mxu0 0.0
    %180 = vmatpush2.msra.mxu0 0.0
    %181 = vmatprep.subr.mxu0 0.0
    %182 = vmatpush2.msra.mxu0 0.0
    %183 = vmatprep.mubr.f32.mxu0 0.0
    %184 = vmatmul.mubr.f32.gmra.mxu0 %v80
    %v185 = vpop.f32.mrf.mxu0
    %v186 = vadd.f32 %v61, %v185
    %v187 = vpop.f32.mrf.mxu0
    %188 = vmatprep.mubr.f32.mxu0 0.0
    %189 = vmatmul.mubr.f32.gmra.mxu0 %v83
    %v190 = vpop.f32.mrf.mxu0
    %v191 = vadd.f32 %v61, %v190
    %v192 = vpop.f32.mrf.mxu0
    %v193 = vadd.f32 %v65, %v192
    %194 = vmatprep.mubr.f32.mxu0 0.0
    %195 = vmatmul.mubr.f32.gmra.mxu0 %v86
    %v196 = vpop.f32.mrf.mxu0
    %v197 = vadd.f32 %v61, %v196
    %v198 = vpop.f32.mrf.mxu0
    %v199 = vadd.f32 %v65, %v198
    %200 = vmatprep.mubr.f32.mxu0 0.0
    %201 = vmatmul.mubr.f32.gmra.mxu0 %v89
    %v202 = vpop.f32.mrf.mxu0
    %v203 = vadd.f32 %v61, %v202
    %v204 = vpop.f32.mrf.mxu0
    %v205 = vadd.f32 %v65, %v204
    %206 = vmatprep.mubr.f32.mxu0 0.0
    %207 = vmatmul.mubr.f32.gmra.mxu0 %v92
    %v208 = vpop.f32.mrf.mxu0
    %v209 = vadd.f32 %v61, %v208
    %v210 = vpop.f32.mrf.mxu0
    %v211 = vadd.f32 %v65, %v210
    %212 = vmatprep.mubr.f32.mxu0 0.0
    %213 = vmatmul.mubr.f32.gmra.mxu0 %v95
    %v214 = vpop.f32.mrf.mxu0
    %v215 = vadd.f32 %v61, %v214
    %v216 = vpop.f32.mrf.mxu0
    %v217 = vadd.f32 %v65, %v216
    %218 = vmatprep.mubr.f32.mxu0 0.0
    %219 = vmatmul.mubr.f32.gmra.mxu0 %v98
    %v220 = vpop.f32.mrf.mxu0
    %v221 = vadd.f32 %v61, %v220
    %v222 = vpop.f32.mrf.mxu0
    %v223 = vadd.f32 %v65, %v222
    %224 = vmatprep.mubr.f32.mxu0 0.0
    %225 = vmatmul.mubr.f32.gmra.mxu0 %v101
    %v226 = vpop.f32.mrf.mxu0
    %v227 = vadd.f32 %v61, %v226
    %v228 = vpop.f32.mrf.mxu0
    %v229 = vadd.f32 %v65, %v228
    %230 = vmatprep.mubr.f32.mxu0 0.0
    %231 = vmatmul.mubr.f32.gmra.mxu0 %v104
    %v232 = vpop.f32.mrf.mxu0
    %v233 = vadd.f32 %v61, %v232
    %v234 = vpop.f32.mrf.mxu0
    %v235 = vadd.f32 %v65, %v234
    %236 = vdwg.mxu0
    %237 = vmatprep.subr.mxu0 0.0
    %238 = vmatpush1.msra.mxu0 0.0
    %239 = vmatprep.subr.mxu0 0.0
    %240 = vmatpush1.msra.mxu0 0.0
    %241 = vmatprep.subr.mxu0 0.0
    %242 = vmatpush1.msra.mxu0 0.0
    %243 = vmatprep.subr.mxu0 0.0
    %244 = vmatpush1.msra.mxu0 0.0
    %245 = vmatprep.subr.mxu0 0.0
    %246 = vmatpush1.msra.mxu0 0.0
    %247 = vmatprep.subr.mxu0 0.0
    %248 = vmatpush1.msra.mxu0 0.0
    %249 = vmatprep.subr.mxu0 0.0
    %250 = vmatpush1.msra.mxu0 0.0
    %251 = vmatprep.subr.mxu0 0.0
    %252 = vmatpush1.msra.mxu0 0.0
    %253 = vmatprep.subr.mxu0 0.0
    %254 = vmatpush1.msra.mxu0 0.0
    %255 = vmatprep.subr.mxu0 0.0
    %256 = vmatpush1.msra.mxu0 0.0
    %257 = vmatprep.subr.mxu0 0.0
    %258 = vmatpush1.msra.mxu0 0.0
    %259 = vmatprep.subr.mxu0 0.0
    %260 = vmatpush1.msra.mxu0 0.0
    %261 = vmatprep.subr.mxu0 0.0
    %262 = vmatpush1.msra.mxu0 0.0
    %263 = vmatprep.subr.mxu0 0.0
    %264 = vmatpush1.msra.mxu0 0.0
    %265 = vmatprep.subr.mxu0 %v117
    %266 = vmatpush1.msra.mxu0 %v114
    %267 = vmatprep.subr.mxu0 %v51
    %268 = vmatpush1.msra.mxu0 %v50
    %269 = vmatprep.subr.mxu0 0.0
    %270 = vmatpush2.msra.mxu0 0.0
    %271 = vmatprep.subr.mxu0 0.0
    %272 = vmatpush2.msra.mxu0 0.0
    %273 = vmatprep.subr.mxu0 0.0
    %274 = vmatpush2.msra.mxu0 0.0
    %275 = vmatprep.subr.mxu0 0.0
    %276 = vmatpush2.msra.mxu0 0.0
    %277 = vmatprep.subr.mxu0 0.0
    %278 = vmatpush2.msra.mxu0 0.0
    %279 = vmatprep.subr.mxu0 0.0
    %280 = vmatpush2.msra.mxu0 0.0
    %281 = vmatprep.subr.mxu0 0.0
    %282 = vmatpush2.msra.mxu0 0.0
    %283 = vmatprep.subr.mxu0 0.0
    %284 = vmatpush2.msra.mxu0 0.0
    %285 = vmatprep.subr.mxu0 0.0
    %286 = vmatpush2.msra.mxu0 0.0
    %287 = vmatprep.subr.mxu0 0.0
    %288 = vmatpush2.msra.mxu0 0.0
    %289 = vmatprep.subr.mxu0 0.0
    %290 = vmatpush2.msra.mxu0 0.0
    %291 = vmatprep.subr.mxu0 0.0
    %292 = vmatpush2.msra.mxu0 0.0
    %293 = vmatprep.subr.mxu0 0.0
    %294 = vmatpush2.msra.mxu0 0.0
    %295 = vmatprep.subr.mxu0 0.0
    %296 = vmatpush2.msra.mxu0 0.0
    %297 = vmatprep.subr.mxu0 0.0
    %298 = vmatpush2.msra.mxu0 0.0
    %299 = vmatprep.subr.mxu0 0.0
    %300 = vmatpush2.msra.mxu0 0.0
    %301 = vmatprep.mubr.f32.mxu0 0.0
    %302 = vmatmul.mubr.f32.gmra.mxu0 %v80
    %v303 = vpop.f32.mrf.mxu0
    %v304 = vadd.f32 %v69, %v303
    %v305 = vpop.f32.mrf.mxu0
    %v306 = vadd.f32 %v73, %v305
    %307 = vmatprep.mubr.f32.mxu0 0.0
    %308 = vmatmul.mubr.f32.gmra.mxu0 %v83
    %v309 = vpop.f32.mrf.mxu0
    %v310 = vadd.f32 %v69, %v309
    %v311 = vpop.f32.mrf.mxu0
    %v312 = vadd.f32 %v73, %v311
    %313 = vmatprep.mubr.f32.mxu0 0.0
    %314 = vmatmul.mubr.f32.gmra.mxu0 %v86
    %v315 = vpop.f32.mrf.mxu0
    %v316 = vadd.f32 %v69, %v315
    %v317 = vpop.f32.mrf.mxu0
    %v318 = vadd.f32 %v73, %v317
    %319 = vmatprep.mubr.f32.mxu0 0.0
    %320 = vmatmul.mubr.f32.gmra.mxu0 %v89
    %v321 = vpop.f32.mrf.mxu0
    %v322 = vadd.f32 %v69, %v321
    %v323 = vpop.f32.mrf.mxu0
    %v324 = vadd.f32 %v73, %v323
    %325 = vmatprep.mubr.f32.mxu0 0.0
    %326 = vmatmul.mubr.f32.gmra.mxu0 %v92
    %v327 = vpop.f32.mrf.mxu0
    %v328 = vadd.f32 %v69, %v327
    %v329 = vpop.f32.mrf.mxu0
    %v330 = vadd.f32 %v73, %v329
    %331 = vmatprep.mubr.f32.mxu0 0.0
    %332 = vmatmul.mubr.f32.gmra.mxu0 %v95
    %v333 = vpop.f32.mrf.mxu0
    %v334 = vadd.f32 %v69, %v333
    %v335 = vpop.f32.mrf.mxu0
    %v336 = vadd.f32 %v73, %v335
    %337 = vmatprep.mubr.f32.mxu0 0.0
    %338 = vmatmul.mubr.f32.gmra.mxu0 %v98
    %v339 = vpop.f32.mrf.mxu0
    %v340 = vadd.f32 %v69, %v339
    %v341 = vpop.f32.mrf.mxu0
    %v342 = vadd.f32 %v73, %v341
    %343 = vmatprep.mubr.f32.mxu0 0.0
    %344 = vmatmul.mubr.f32.gmra.mxu0 %v101
    %v345 = vpop.f32.mrf.mxu0
    %v346 = vadd.f32 %v69, %v345
    %v347 = vpop.f32.mrf.mxu0
    %v348 = vadd.f32 %v73, %v347
    %349 = vmatprep.mubr.f32.mxu0 0.0
    %350 = vmatmul.mubr.f32.gmra.mxu0 %v104
    %v351 = vpop.f32.mrf.mxu0
    %v352 = vadd.f32 %v69, %v351
    %v353 = vpop.f32.mrf.mxu0
    %v354 = vadd.f32 %v73, %v353
    %355 = vdwg.mxu0
    %v356 = vld [vmem:[#allocation3] sm:$0xff]
    %v357 = vld [vmem:[#allocation3 + $0x8] sm:$0xff]
    %v358 = vld [vmem:[#allocation3 + $0x10] sm:$0xff]
    %v359 = vld [vmem:[#allocation3 + $0x18] sm:$0xff]
    %v360 = vld [vmem:[#allocation3 + $0x20] sm:$0xff]
    %v361 = vld [vmem:[#allocation3 + $0x28] sm:$0xff]
    %v362 = vld [vmem:[#allocation3 + $0x30] sm:$0xff]
    %v363 = vld [vmem:[#allocation3 + $0x38] sm:$0xff]
    %v364 = vld [vmem:[#allocation3 + $0x40] sm:$0xff]
    %v365 = vld [vmem:[#allocation3 + $0x48] sm:$0xff]
    %v366 = vld [vmem:[#allocation3 + $0x50] sm:$0xff]
    %v367 = vld [vmem:[#allocation3 + $0x58] sm:$0xff]
    %v368 = vld [vmem:[#allocation3 + $0x60] sm:$0xff]
    %v369 = vld [vmem:[#allocation3 + $0x68] sm:$0xff]
    %v370 = vld [vmem:[#allocation3 + $0x70] sm:$0xff]
    %v371 = vld [vmem:[#allocation3 + $0x78] sm:$0xff]
    %v372 = vld [vmem:[#allocation3 + $0x80] sm:$0xff]
    %v373 = vld [vmem:[#allocation3 + $0x88] sm:$0xff]
    %v374 = vld [vmem:[#allocation3 + $0x90] sm:$0xff]
    %v375 = vld [vmem:[#allocation3 + $0x98] sm:$0xff]
    %v376 = vld [vmem:[#allocation3 + $0xa0] sm:$0xff]
    %v377 = vld [vmem:[#allocation3 + $0xa8] sm:$0xff]
    %v378 = vld [vmem:[#allocation3 + $0xb0] sm:$0xff]
    %v379 = vld [vmem:[#allocation3 + $0xb8] sm:$0xff]
    %v380 = vld [vmem:[#allocation3 + $0xc0] sm:$0xff]
    %v381 = vld [vmem:[#allocation3 + $0xc8] sm:$0xff]
    %v382 = vld [vmem:[#allocation3 + $0xd0] sm:$0xff]
    %v383 = vld [vmem:[#allocation3 + $0xd8] sm:$0xff]
    %v384 = vld [vmem:[#allocation3 + $0xe0] sm:$0xff]
    %v385 = vld [vmem:[#allocation3 + $0xe8] sm:$0xff]
    %v386 = vld [vmem:[#allocation3 + $0xf0] sm:$0xff]
    %v387 = vld [vmem:[#allocation3 + $0xf8] sm:$0xff]
    %v388 = vld [vmem:[#allocation3 + $0x100] sm:$0xff]
    %v389 = vld [vmem:[#allocation3 + $0x108] sm:$0xff]
    %v390 = vld [vmem:[#allocation3 + $0x110] sm:$0xff]
    %v391 = vld [vmem:[#allocation3 + $0x118] sm:$0xff]
    %v392 = vld [vmem:[#allocation3 + $0x120] sm:$0xff]
    %v393 = vld [vmem:[#allocation3 + $0x128] sm:$0xff]
    %v394 = vld [vmem:[#allocation3 + $0x130] sm:$0xff]
    %v395 = vld [vmem:[#allocation3 + $0x138] sm:$0xff]
    %v396 = vld [vmem:[#allocation3 + $0x140] sm:$0xff]
    %v397 = vld [vmem:[#allocation3 + $0x148] sm:$0xff]
    %v398 = vld [vmem:[#allocation3 + $0x150] sm:$0xff]
    %v399 = vld [vmem:[#allocation3 + $0x158] sm:$0xff]
    %v400 = vld [vmem:[#allocation3 + $0x160] sm:$0xff]
    %v401 = vld [vmem:[#allocation3 + $0x168] sm:$0xff]
    %v402 = vld [vmem:[#allocation3 + $0x170] sm:$0xff]
    %v403 = vld [vmem:[#allocation3 + $0x178] sm:$0xff]
    %v404 = vld [vmem:[#allocation3 + $0x180] sm:$0xff]
    %v405 = vld [vmem:[#allocation3 + $0x188] sm:$0xff]
    %v406 = vld [vmem:[#allocation3 + $0x190] sm:$0xff]
    %v407 = vld [vmem:[#allocation3 + $0x198] sm:$0xff]
    %v408 = vld [vmem:[#allocation3 + $0x1a0] sm:$0xff]
    %v409 = vld [vmem:[#allocation3 + $0x1a8] sm:$0xff]
    %v410 = vld [vmem:[#allocation3 + $0x1b0] sm:$0xff]
    %v411 = vld [vmem:[#allocation3 + $0x1b8] sm:$0xff]
    %v412 = vld [vmem:[#allocation3 + $0x1c0] sm:$0xff]
    %v413 = vld [vmem:[#allocation3 + $0x1c8] sm:$0xff]
    %v414 = vld [vmem:[#allocation3 + $0x1d0] sm:$0xff]
    %v415 = vld [vmem:[#allocation3 + $0x1d8] sm:$0xff]
    %v416 = vld [vmem:[#allocation3 + $0x1e0] sm:$0xff]
    %v417 = vld [vmem:[#allocation3 + $0x1e8] sm:$0xff]
    %v418 = vld [vmem:[#allocation3 + $0x1f0] sm:$0xff]
    %v419 = vld [vmem:[#allocation3 + $0x1f8] sm:$0xff]
    %v420 = vlaneseq
    %v421 = vand.u32 %v420, 127
    %vm422 = vcmp.lt.s32.totalorder %v421, 64
    %v423 = vsel %vm422, 1, 0
    %v424 = vcvt.s32.f32 %v423
    %v425 = vxor.u32 %v186, 2147483648
    %v426 = vxor.u32 %v304, 2147483648
    %v427 = vmul.f32 %v425, 1.442695
    %v428 = vpow.pop %v427
    %v429 = vmul.f32 %v426, 1.442695
    %v430 = vpow.pop %v429
    %v431 = vadd.f32 %v428, 1.0
    %v432 = vadd.f32 %v430, 1.0
    %v433 = vrcp.pop %v431
    %v434 = vmul.f32 1.0, %v433
    %v435 = vrcp.pop %v432
    %v436 = vmul.f32 1.0, %v435
    %v437 = vtanh.pop %v306
    %v438 = vmul.f32 %v434, %v437
    %v439 = vmul.f32 %v438, %v424
    %v440 = vtanh.pop %v439
    %v441 = vmul.f32 %v436, %v440
    %442 = vmatprep.subr.mxu0 %v417
    %443 = vmatpush1.msra.mxu0 %v416
    %444 = vmatprep.subr.mxu0 %v413
    %445 = vmatpush1.msra.mxu0 %v412
    %446 = vmatprep.subr.mxu0 %v409
    %447 = vmatpush1.msra.mxu0 %v408
    %448 = vmatprep.subr.mxu0 %v405
    %449 = vmatpush1.msra.mxu0 %v404
    %450 = vmatprep.subr.mxu0 %v401
    %451 = vmatpush1.msra.mxu0 %v400
    %452 = vmatprep.subr.mxu0 %v397
    %453 = vmatpush1.msra.mxu0 %v396
    %454 = vmatprep.subr.mxu0 %v393
    %455 = vmatpush1.msra.mxu0 %v392
    %456 = vmatprep.subr.mxu0 %v389
    %457 = vmatpush1.msra.mxu0 %v388
    %458 = vmatprep.subr.mxu0 %v385
    %459 = vmatpush1.msra.mxu0 %v384
    %460 = vmatprep.subr.mxu0 %v381
    %461 = vmatpush1.msra.mxu0 %v380
    %462 = vmatprep.subr.mxu0 %v377
    %463 = vmatpush1.msra.mxu0 %v376
    %464 = vmatprep.subr.mxu0 %v373
    %465 = vmatpush1.msra.mxu0 %v372
    %466 = vmatprep.subr.mxu0 %v369
    %467 = vmatpush1.msra.mxu0 %v368
    %468 = vmatprep.subr.mxu0 %v365
    %469 = vmatpush1.msra.mxu0 %v364
    %470 = vmatprep.subr.mxu0 %v361
    %471 = vmatpush1.msra.mxu0 %v360
    %472 = vmatprep.subr.mxu0 %v357
    %473 = vmatpush1.msra.mxu0 %v356
    %474 = vmatprep.subr.mxu0 0.0
    %475 = vmatpush2.msra.mxu0 0.0
    %476 = vmatprep.subr.mxu0 0.0
    %477 = vmatpush2.msra.mxu0 0.0
    %478 = vmatprep.subr.mxu0 0.0
    %479 = vmatpush2.msra.mxu0 0.0
    %480 = vmatprep.subr.mxu0 0.0
    %481 = vmatpush2.msra.mxu0 0.0
    %482 = vmatprep.subr.mxu0 0.0
    %483 = vmatpush2.msra.mxu0 0.0
    %484 = vmatprep.subr.mxu0 0.0
    %485 = vmatpush2.msra.mxu0 0.0
    %486 = vmatprep.subr.mxu0 0.0
    %487 = vmatpush2.msra.mxu0 0.0
    %488 = vmatprep.subr.mxu0 0.0
    %489 = vmatpush2.msra.mxu0 0.0
    %490 = vmatprep.subr.mxu0 0.0
    %491 = vmatpush2.msra.mxu0 0.0
    %492 = vmatprep.subr.mxu0 0.0
    %493 = vmatpush2.msra.mxu0 0.0
    %494 = vmatprep.subr.mxu0 0.0
    %495 = vmatpush2.msra.mxu0 0.0
    %496 = vmatprep.subr.mxu0 0.0
    %497 = vmatpush2.msra.mxu0 0.0
    %498 = vmatprep.subr.mxu0 0.0
    %499 = vmatpush2.msra.mxu0 0.0
    %500 = vmatprep.subr.mxu0 0.0
    %501 = vmatpush2.msra.mxu0 0.0
    %502 = vmatprep.subr.mxu0 0.0
    %503 = vmatpush2.msra.mxu0 0.0
    %504 = vmatprep.subr.mxu0 0.0
    %505 = vmatpush2.msra.mxu0 0.0
    %506 = vmatprep.mubr.f32.mxu0 0.0
    %507 = vmatmul.mubr.f32.gmra.mxu0 %v441
    %v508 = vpop.f32.mrf.mxu0
    %v509 = vadd.f32 %v191, %v508
    %v510 = vpop.f32.mrf.mxu0
    %v511 = vadd.f32 %v193, %v510
    %512 = vdwg.mxu0
    %513 = vmatprep.subr.mxu0 %v419
    %514 = vmatpush1.msra.mxu0 %v418
    %515 = vmatprep.subr.mxu0 %v415
    %516 = vmatpush1.msra.mxu0 %v414
    %517 = vmatprep.subr.mxu0 %v411
    %518 = vmatpush1.msra.mxu0 %v410
    %519 = vmatprep.subr.mxu0 %v407
    %520 = vmatpush1.msra.mxu0 %v406
    %521 = vmatprep.subr.mxu0 %v403
    %522 = vmatpush1.msra.mxu0 %v402
    %523 = vmatprep.subr.mxu0 %v399
    %524 = vmatpush1.msra.mxu0 %v398
    %525 = vmatprep.subr.mxu0 %v395
    %526 = vmatpush1.msra.mxu0 %v394
    %527 = vmatprep.subr.mxu0 %v391
    %528 = vmatpush1.msra.mxu0 %v390
    %529 = vmatprep.subr.mxu0 %v387
    %530 = vmatpush1.msra.mxu0 %v386
    %531 = vmatprep.subr.mxu0 %v383
    %532 = vmatpush1.msra.mxu0 %v382
    %533 = vmatprep.subr.mxu0 %v379
    %534 = vmatpush1.msra.mxu0 %v378
    %535 = vmatprep.subr.mxu0 %v375
    %536 = vmatpush1.msra.mxu0 %v374
    %537 = vmatprep.subr.mxu0 %v371
    %538 = vmatpush1.msra.mxu0 %v370
    %539 = vmatprep.subr.mxu0 %v367
    %540 = vmatpush1.msra.mxu0 %v366
    %541 = vmatprep.subr.mxu0 %v363
    %542 = vmatpush1.msra.mxu0 %v362
    %543 = vmatprep.subr.mxu0 %v359
    %544 = vmatpush1.msra.mxu0 %v358
    %545 = vmatprep.subr.mxu0 0.0
    %546 = vmatpush2.msra.mxu0 0.0
    %547 = vmatprep.subr.mxu0 0.0
    %548 = vmatpush2.msra.mxu0 0.0
    %549 = vmatprep.subr.mxu0 0.0
    %550 = vmatpush2.msra.mxu0 0.0
    %551 = vmatprep.subr.mxu0 0.0
    %552 = vmatpush2.msra.mxu0 0.0
    %553 = vmatprep.subr.mxu0 0.0
    %554 = vmatpush2.msra.mxu0 0.0
    %555 = vmatprep.subr.mxu0 0.0
    %556 = vmatpush2.msra.mxu0 0.0
    %557 = vmatprep.subr.mxu0 0.0
    %558 = vmatpush2.msra.mxu0 0.0
    %559 = vmatprep.subr.mxu0 0.0
    %560 = vmatpush2.msra.mxu0 0.0
    %561 = vmatprep.subr.mxu0 0.0
    %562 = vmatpush2.msra.mxu0 0.0
    %563 = vmatprep.subr.mxu0 0.0
    %564 = vmatpush2.msra.mxu0 0.0
    %565 = vmatprep.subr.mxu0 0.0
    %566 = vmatpush2.msra.mxu0 0.0
    %567 = vmatprep.subr.mxu0 0.0
    %568 = vmatpush2.msra.mxu0 0.0
    %569 = vmatprep.subr.mxu0 0.0
    %570 = vmatpush2.msra.mxu0 0.0
    %571 = vmatprep.subr.mxu0 0.0
    %572 = vmatpush2.msra.mxu0 0.0
    %573 = vmatprep.subr.mxu0 0.0
    %574 = vmatpush2.msra.mxu0 0.0
    %575 = vmatprep.subr.mxu0 0.0
    %576 = vmatpush2.msra.mxu0 0.0
    %577 = vmatprep.mubr.f32.mxu0 0.0
    %578 = vmatmul.mubr.f32.gmra.mxu0 %v441
    %v579 = vpop.f32.mrf.mxu0
    %v580 = vadd.f32 %v310, %v579
    %v581 = vpop.f32.mrf.mxu0
    %v582 = vadd.f32 %v312, %v581
    %583 = vdwg.mxu0
    %v584 = vxor.u32 %v509, 2147483648
    %v585 = vxor.u32 %v511, 2147483648
    %v586 = vxor.u32 %v580, 2147483648
    %v587 = vmul.f32 %v584, 1.442695
    %v588 = vpow.pop %v587
    %v589 = vmul.f32 %v585, 1.442695
    %v590 = vpow.pop %v589
    %v591 = vmul.f32 %v586, 1.442695
    %v592 = vpow.pop %v591
    %v593 = vadd.f32 %v588, 1.0
    %v594 = vadd.f32 %v590, 1.0
    %v595 = vadd.f32 %v592, 1.0
    %v596 = vrcp.pop %v593
    %v597 = vmul.f32 1.0, %v596
    %v598 = vrcp.pop %v594
    %v599 = vmul.f32 1.0, %v598
    %v600 = vrcp.pop %v595
    %v601 = vmul.f32 1.0, %v600
    %v602 = vtanh.pop %v582
    %v603 = vmul.f32 %v599, %v439
    %v604 = vmul.f32 %v597, %v602
    %v605 = vadd.f32 %v603, %v604
    %v606 = vtanh.pop %v605
    %v607 = vmul.f32 %v601, %v606
    %608 = vmatprep.subr.mxu0 %v417
    %609 = vmatpush1.msra.mxu0 %v416
    %610 = vmatprep.subr.mxu0 %v413
    %611 = vmatpush1.msra.mxu0 %v412
    %612 = vmatprep.subr.mxu0 %v409
    %613 = vmatpush1.msra.mxu0 %v408
    %614 = vmatprep.subr.mxu0 %v405
    %615 = vmatpush1.msra.mxu0 %v404
    %616 = vmatprep.subr.mxu0 %v401
    %617 = vmatpush1.msra.mxu0 %v400
    %618 = vmatprep.subr.mxu0 %v397
    %619 = vmatpush1.msra.mxu0 %v396
    %620 = vmatprep.subr.mxu0 %v393
    %621 = vmatpush1.msra.mxu0 %v392
    %622 = vmatprep.subr.mxu0 %v389
    %623 = vmatpush1.msra.mxu0 %v388
    %624 = vmatprep.subr.mxu0 %v385
    %625 = vmatpush1.msra.mxu0 %v384
    %626 = vmatprep.subr.mxu0 %v381
    %627 = vmatpush1.msra.mxu0 %v380
    %628 = vmatprep.subr.mxu0 %v377
    %629 = vmatpush1.msra.mxu0 %v376
    %630 = vmatprep.subr.mxu0 %v373
    %631 = vmatpush1.msra.mxu0 %v372
    %632 = vmatprep.subr.mxu0 %v369
    %633 = vmatpush1.msra.mxu0 %v368
    %634 = vmatprep.subr.mxu0 %v365
    %635 = vmatpush1.msra.mxu0 %v364
    %636 = vmatprep.subr.mxu0 %v361
    %637 = vmatpush1.msra.mxu0 %v360
    %638 = vmatprep.subr.mxu0 %v357
    %639 = vmatpush1.msra.mxu0 %v356
    %640 = vmatprep.subr.mxu0 0.0
    %641 = vmatpush2.msra.mxu0 0.0
    %642 = vmatprep.subr.mxu0 0.0
    %643 = vmatpush2.msra.mxu0 0.0
    %644 = vmatprep.subr.mxu0 0.0
    %645 = vmatpush2.msra.mxu0 0.0
    %646 = vmatprep.subr.mxu0 0.0
    %647 = vmatpush2.msra.mxu0 0.0
    %648 = vmatprep.subr.mxu0 0.0
    %649 = vmatpush2.msra.mxu0 0.0
    %650 = vmatprep.subr.mxu0 0.0
    %651 = vmatpush2.msra.mxu0 0.0
    %652 = vmatprep.subr.mxu0 0.0
    %653 = vmatpush2.msra.mxu0 0.0
    %654 = vmatprep.subr.mxu0 0.0
    %655 = vmatpush2.msra.mxu0 0.0
    %656 = vmatprep.subr.mxu0 0.0
    %657 = vmatpush2.msra.mxu0 0.0
    %658 = vmatprep.subr.mxu0 0.0
    %659 = vmatpush2.msra.mxu0 0.0
    %660 = vmatprep.subr.mxu0 0.0
    %661 = vmatpush2.msra.mxu0 0.0
    %662 = vmatprep.subr.mxu0 0.0
    %663 = vmatpush2.msra.mxu0 0.0
    %664 = vmatprep.subr.mxu0 0.0
    %665 = vmatpush2.msra.mxu0 0.0
    %666 = vmatprep.subr.mxu0 0.0
    %667 = vmatpush2.msra.mxu0 0.0
    %668 = vmatprep.subr.mxu0 0.0
    %669 = vmatpush2.msra.mxu0 0.0
    %670 = vmatprep.subr.mxu0 0.0
    %671 = vmatpush2.msra.mxu0 0.0
    %672 = vmatprep.mubr.f32.mxu0 0.0
    %673 = vmatmul.mubr.f32.gmra.mxu0 %v607
    %v674 = vpop.f32.mrf.mxu0
    %v675 = vadd.f32 %v197, %v674
    %v676 = vpop.f32.mrf.mxu0
    %v677 = vadd.f32 %v199, %v676
    %678 = vdwg.mxu0
    %679 = vmatprep.subr.mxu0 %v419
    %680 = vmatpush1.msra.mxu0 %v418
    %681 = vmatprep.subr.mxu0 %v415
    %682 = vmatpush1.msra.mxu0 %v414
    %683 = vmatprep.subr.mxu0 %v411
    %684 = vmatpush1.msra.mxu0 %v410
    %685 = vmatprep.subr.mxu0 %v407
    %686 = vmatpush1.msra.mxu0 %v406
    %687 = vmatprep.subr.mxu0 %v403
    %688 = vmatpush1.msra.mxu0 %v402
    %689 = vmatprep.subr.mxu0 %v399
    %690 = vmatpush1.msra.mxu0 %v398
    %691 = vmatprep.subr.mxu0 %v395
    %692 = vmatpush1.msra.mxu0 %v394
    %693 = vmatprep.subr.mxu0 %v391
    %694 = vmatpush1.msra.mxu0 %v390
    %695 = vmatprep.subr.mxu0 %v387
    %696 = vmatpush1.msra.mxu0 %v386
    %697 = vmatprep.subr.mxu0 %v383
    %698 = vmatpush1.msra.mxu0 %v382
    %699 = vmatprep.subr.mxu0 %v379
    %700 = vmatpush1.msra.mxu0 %v378
    %701 = vmatprep.subr.mxu0 %v375
    %702 = vmatpush1.msra.mxu0 %v374
    %703 = vmatprep.subr.mxu0 %v371
    %704 = vmatpush1.msra.mxu0 %v370
    %705 = vmatprep.subr.mxu0 %v367
    %706 = vmatpush1.msra.mxu0 %v366
    %707 = vmatprep.subr.mxu0 %v363
    %708 = vmatpush1.msra.mxu0 %v362
    %709 = vmatprep.subr.mxu0 %v359
    %710 = vmatpush1.msra.mxu0 %v358
    %711 = vmatprep.subr.mxu0 0.0
    %712 = vmatpush2.msra.mxu0 0.0
    %713 = vmatprep.subr.mxu0 0.0
    %714 = vmatpush2.msra.mxu0 0.0
    %715 = vmatprep.subr.mxu0 0.0
    %716 = vmatpush2.msra.mxu0 0.0
    %717 = vmatprep.subr.mxu0 0.0
    %718 = vmatpush2.msra.mxu0 0.0
    %719 = vmatprep.subr.mxu0 0.0
    %720 = vmatpush2.msra.mxu0 0.0
    %721 = vmatprep.subr.mxu0 0.0
    %722 = vmatpush2.msra.mxu0 0.0
    %723 = vmatprep.subr.mxu0 0.0
    %724 = vmatpush2.msra.mxu0 0.0
    %725 = vmatprep.subr.mxu0 0.0
    %726 = vmatpush2.msra.mxu0 0.0
    %727 = vmatprep.subr.mxu0 0.0
    %728 = vmatpush2.msra.mxu0 0.0
    %729 = vmatprep.subr.mxu0 0.0
    %730 = vmatpush2.msra.mxu0 0.0
    %731 = vmatprep.subr.mxu0 0.0
    %732 = vmatpush2.msra.mxu0 0.0
    %733 = vmatprep.subr.mxu0 0.0
    %734 = vmatpush2.msra.mxu0 0.0
    %735 = vmatprep.subr.mxu0 0.0
    %736 = vmatpush2.msra.mxu0 0.0
    %737 = vmatprep.subr.mxu0 0.0
    %738 = vmatpush2.msra.mxu0 0.0
    %739 = vmatprep.subr.mxu0 0.0
    %740 = vmatpush2.msra.mxu0 0.0
    %741 = vmatprep.subr.mxu0 0.0
    %742 = vmatpush2.msra.mxu0 0.0
    %743 = vmatprep.mubr.f32.mxu0 0.0
    %744 = vmatmul.mubr.f32.gmra.mxu0 %v607
    %v745 = vpop.f32.mrf.mxu0
    %v746 = vadd.f32 %v316, %v745
    %v747 = vpop.f32.mrf.mxu0
    %v748 = vadd.f32 %v318, %v747
    %749 = vdwg.mxu0
    %v750 = vxor.u32 %v675, 2147483648
    %v751 = vxor.u32 %v677, 2147483648
    %v752 = vxor.u32 %v746, 2147483648
    %v753 = vmul.f32 %v750, 1.442695
    %v754 = vpow.pop %v753
    %v755 = vmul.f32 %v751, 1.442695
    %v756 = vpow.pop %v755
    %v757 = vmul.f32 %v752, 1.442695
    %v758 = vpow.pop %v757
    %v759 = vadd.f32 %v754, 1.0
    %v760 = vadd.f32 %v756, 1.0
    %v761 = vadd.f32 %v758, 1.0
    %v762 = vrcp.pop %v759
    %v763 = vmul.f32 1.0, %v762
    %v764 = vrcp.pop %v760
    %v765 = vmul.f32 1.0, %v764
    %v766 = vrcp.pop %v761
    %v767 = vmul.f32 1.0, %v766
    %v768 = vtanh.pop %v748
    %v769 = vmul.f32 %v765, %v605
    %v770 = vmul.f32 %v763, %v768
    %v771 = vadd.f32 %v769, %v770
    %v772 = vtanh.pop %v771
    %v773 = vmul.f32 %v767, %v772
    %774 = vmatprep.subr.mxu0 %v417
    %775 = vmatpush1.msra.mxu0 %v416
    %776 = vmatprep.subr.mxu0 %v413
    %777 = vmatpush1.msra.mxu0 %v412
    %778 = vmatprep.subr.mxu0 %v409
    %779 = vmatpush1.msra.mxu0 %v408
    %780 = vmatprep.subr.mxu0 %v405
    %781 = vmatpush1.msra.mxu0 %v404
    %782 = vmatprep.subr.mxu0 %v401
    %783 = vmatpush1.msra.mxu0 %v400
    %784 = vmatprep.subr.mxu0 %v397
    %785 = vmatpush1.msra.mxu0 %v396
    %786 = vmatprep.subr.mxu0 %v393
    %787 = vmatpush1.msra.mxu0 %v392
    %788 = vmatprep.subr.mxu0 %v389
    %789 = vmatpush1.msra.mxu0 %v388
    %790 = vmatprep.subr.mxu0 %v385
    %791 = vmatpush1.msra.mxu0 %v384
    %792 = vmatprep.subr.mxu0 %v381
    %793 = vmatpush1.msra.mxu0 %v380
    %794 = vmatprep.subr.mxu0 %v377
    %795 = vmatpush1.msra.mxu0 %v376
    %796 = vmatprep.subr.mxu0 %v373
    %797 = vmatpush1.msra.mxu0 %v372
    %798 = vmatprep.subr.mxu0 %v369
    %799 = vmatpush1.msra.mxu0 %v368
    %800 = vmatprep.subr.mxu0 %v365
    %801 = vmatpush1.msra.mxu0 %v364
    %802 = vmatprep.subr.mxu0 %v361
    %803 = vmatpush1.msra.mxu0 %v360
    %804 = vmatprep.subr.mxu0 %v357
    %805 = vmatpush1.msra.mxu0 %v356
    %806 = vmatprep.subr.mxu0 0.0
    %807 = vmatpush2.msra.mxu0 0.0
    %808 = vmatprep.subr.mxu0 0.0
    %809 = vmatpush2.msra.mxu0 0.0
    %810 = vmatprep.subr.mxu0 0.0
    %811 = vmatpush2.msra.mxu0 0.0
    %812 = vmatprep.subr.mxu0 0.0
    %813 = vmatpush2.msra.mxu0 0.0
    %814 = vmatprep.subr.mxu0 0.0
    %815 = vmatpush2.msra.mxu0 0.0
    %816 = vmatprep.subr.mxu0 0.0
    %817 = vmatpush2.msra.mxu0 0.0
    %818 = vmatprep.subr.mxu0 0.0
    %819 = vmatpush2.msra.mxu0 0.0
    %820 = vmatprep.subr.mxu0 0.0
    %821 = vmatpush2.msra.mxu0 0.0
    %822 = vmatprep.subr.mxu0 0.0
    %823 = vmatpush2.msra.mxu0 0.0
    %824 = vmatprep.subr.mxu0 0.0
    %825 = vmatpush2.msra.mxu0 0.0
    %826 = vmatprep.subr.mxu0 0.0
    %827 = vmatpush2.msra.mxu0 0.0
    %828 = vmatprep.subr.mxu0 0.0
    %829 = vmatpush2.msra.mxu0 0.0
    %830 = vmatprep.subr.mxu0 0.0
    %831 = vmatpush2.msra.mxu0 0.0
    %832 = vmatprep.subr.mxu0 0.0
    %833 = vmatpush2.msra.mxu0 0.0
    %834 = vmatprep.subr.mxu0 0.0
    %835 = vmatpush2.msra.mxu0 0.0
    %836 = vmatprep.subr.mxu0 0.0
    %837 = vmatpush2.msra.mxu0 0.0
    %838 = vmatprep.mubr.f32.mxu0 0.0
    %839 = vmatmul.mubr.f32.gmra.mxu0 %v773
    %v840 = vpop.f32.mrf.mxu0
    %v841 = vadd.f32 %v203, %v840
    %v842 = vpop.f32.mrf.mxu0
    %v843 = vadd.f32 %v205, %v842
    %844 = vdwg.mxu0
    %845 = vmatprep.subr.mxu0 %v419
    %846 = vmatpush1.msra.mxu0 %v418
    %847 = vmatprep.subr.mxu0 %v415
    %848 = vmatpush1.msra.mxu0 %v414
    %849 = vmatprep.subr.mxu0 %v411
    %850 = vmatpush1.msra.mxu0 %v410
    %851 = vmatprep.subr.mxu0 %v407
    %852 = vmatpush1.msra.mxu0 %v406
    %853 = vmatprep.subr.mxu0 %v403
    %854 = vmatpush1.msra.mxu0 %v402
    %855 = vmatprep.subr.mxu0 %v399
    %856 = vmatpush1.msra.mxu0 %v398
    %857 = vmatprep.subr.mxu0 %v395
    %858 = vmatpush1.msra.mxu0 %v394
    %859 = vmatprep.subr.mxu0 %v391
    %860 = vmatpush1.msra.mxu0 %v390
    %861 = vmatprep.subr.mxu0 %v387
    %862 = vmatpush1.msra.mxu0 %v386
    %863 = vmatprep.subr.mxu0 %v383
    %864 = vmatpush1.msra.mxu0 %v382
    %865 = vmatprep.subr.mxu0 %v379
    %866 = vmatpush1.msra.mxu0 %v378
    %867 = vmatprep.subr.mxu0 %v375
    %868 = vmatpush1.msra.mxu0 %v374
    %869 = vmatprep.subr.mxu0 %v371
    %870 = vmatpush1.msra.mxu0 %v370
    %871 = vmatprep.subr.mxu0 %v367
    %872 = vmatpush1.msra.mxu0 %v366
    %873 = vmatprep.subr.mxu0 %v363
    %874 = vmatpush1.msra.mxu0 %v362
    %875 = vmatprep.subr.mxu0 %v359
    %876 = vmatpush1.msra.mxu0 %v358
    %877 = vmatprep.subr.mxu0 0.0
    %878 = vmatpush2.msra.mxu0 0.0
    %879 = vmatprep.subr.mxu0 0.0
    %880 = vmatpush2.msra.mxu0 0.0
    %881 = vmatprep.subr.mxu0 0.0
    %882 = vmatpush2.msra.mxu0 0.0
    %883 = vmatprep.subr.mxu0 0.0
    %884 = vmatpush2.msra.mxu0 0.0
    %885 = vmatprep.subr.mxu0 0.0
    %886 = vmatpush2.msra.mxu0 0.0
    %887 = vmatprep.subr.mxu0 0.0
    %888 = vmatpush2.msra.mxu0 0.0
    %889 = vmatprep.subr.mxu0 0.0
    %890 = vmatpush2.msra.mxu0 0.0
    %891 = vmatprep.subr.mxu0 0.0
    %892 = vmatpush2.msra.mxu0 0.0
    %893 = vmatprep.subr.mxu0 0.0
    %894 = vmatpush2.msra.mxu0 0.0
    %895 = vmatprep.subr.mxu0 0.0
    %896 = vmatpush2.msra.mxu0 0.0
    %897 = vmatprep.subr.mxu0 0.0
    %898 = vmatpush2.msra.mxu0 0.0
    %899 = vmatprep.subr.mxu0 0.0
    %900 = vmatpush2.msra.mxu0 0.0
    %901 = vmatprep.subr.mxu0 0.0
    %902 = vmatpush2.msra.mxu0 0.0
    %903 = vmatprep.subr.mxu0 0.0
    %904 = vmatpush2.msra.mxu0 0.0
    %905 = vmatprep.subr.mxu0 0.0
    %906 = vmatpush2.msra.mxu0 0.0
    %907 = vmatprep.subr.mxu0 0.0
    %908 = vmatpush2.msra.mxu0 0.0
    %909 = vmatprep.mubr.f32.mxu0 0.0
    %910 = vmatmul.mubr.f32.gmra.mxu0 %v773
    %v911 = vpop.f32.mrf.mxu0
    %v912 = vadd.f32 %v322, %v911
    %v913 = vpop.f32.mrf.mxu0
    %v914 = vadd.f32 %v324, %v913
    %915 = vdwg.mxu0
    %v916 = vxor.u32 %v841, 2147483648
    %v917 = vxor.u32 %v843, 2147483648
    %v918 = vxor.u32 %v912, 2147483648
    %v919 = vmul.f32 %v916, 1.442695
    %v920 = vpow.pop %v919
    %v921 = vmul.f32 %v917, 1.442695
    %v922 = vpow.pop %v921
    %v923 = vmul.f32 %v918, 1.442695
    %v924 = vpow.pop %v923
    %v925 = vadd.f32 %v920, 1.0
    %v926 = vadd.f32 %v922, 1.0
    %v927 = vadd.f32 %v924, 1.0
    %v928 = vrcp.pop %v925
    %v929 = vmul.f32 1.0, %v928
    %v930 = vrcp.pop %v926
    %v931 = vmul.f32 1.0, %v930
    %v932 = vrcp.pop %v927
    %v933 = vmul.f32 1.0, %v932
    %v934 = vtanh.pop %v914
    %v935 = vmul.f32 %v931, %v771
    %v936 = vmul.f32 %v929, %v934
    %v937 = vadd.f32 %v935, %v936
    %v938 = vtanh.pop %v937
    %v939 = vmul.f32 %v933, %v938
    %940 = vmatprep.subr.mxu0 %v417
    %941 = vmatpush1.msra.mxu0 %v416
    %942 = vmatprep.subr.mxu0 %v413
    %943 = vmatpush1.msra.mxu0 %v412
    %944 = vmatprep.subr.mxu0 %v409
    %945 = vmatpush1.msra.mxu0 %v408
    %946 = vmatprep.subr.mxu0 %v405
    %947 = vmatpush1.msra.mxu0 %v404
    %948 = vmatprep.subr.mxu0 %v401
    %949 = vmatpush1.msra.mxu0 %v400
    %950 = vmatprep.subr.mxu0 %v397
    %951 = vmatpush1.msra.mxu0 %v396
    %952 = vmatprep.subr.mxu0 %v393
    %953 = vmatpush1.msra.mxu0 %v392
    %954 = vmatprep.subr.mxu0 %v389
    %955 = vmatpush1.msra.mxu0 %v388
    %956 = vmatprep.subr.mxu0 %v385
    %957 = vmatpush1.msra.mxu0 %v384
    %958 = vmatprep.subr.mxu0 %v381
    %959 = vmatpush1.msra.mxu0 %v380
    %960 = vmatprep.subr.mxu0 %v377
    %961 = vmatpush1.msra.mxu0 %v376
    %962 = vmatprep.subr.mxu0 %v373
    %963 = vmatpush1.msra.mxu0 %v372
    %964 = vmatprep.subr.mxu0 %v369
    %965 = vmatpush1.msra.mxu0 %v368
    %966 = vmatprep.subr.mxu0 %v365
    %967 = vmatpush1.msra.mxu0 %v364
    %968 = vmatprep.subr.mxu0 %v361
    %969 = vmatpush1.msra.mxu0 %v360
    %970 = vmatprep.subr.mxu0 %v357
    %971 = vmatpush1.msra.mxu0 %v356
    %972 = vmatprep.subr.mxu0 0.0
    %973 = vmatpush2.msra.mxu0 0.0
    %974 = vmatprep.subr.mxu0 0.0
    %975 = vmatpush2.msra.mxu0 0.0
    %976 = vmatprep.subr.mxu0 0.0
    %977 = vmatpush2.msra.mxu0 0.0
    %978 = vmatprep.subr.mxu0 0.0
    %979 = vmatpush2.msra.mxu0 0.0
    %980 = vmatprep.subr.mxu0 0.0
    %981 = vmatpush2.msra.mxu0 0.0
    %982 = vmatprep.subr.mxu0 0.0
    %983 = vmatpush2.msra.mxu0 0.0
    %984 = vmatprep.subr.mxu0 0.0
    %985 = vmatpush2.msra.mxu0 0.0
    %986 = vmatprep.subr.mxu0 0.0
    %987 = vmatpush2.msra.mxu0 0.0
    %988 = vmatprep.subr.mxu0 0.0
    %989 = vmatpush2.msra.mxu0 0.0
    %990 = vmatprep.subr.mxu0 0.0
    %991 = vmatpush2.msra.mxu0 0.0
    %992 = vmatprep.subr.mxu0 0.0
    %993 = vmatpush2.msra.mxu0 0.0
    %994 = vmatprep.subr.mxu0 0.0
    %995 = vmatpush2.msra.mxu0 0.0
    %996 = vmatprep.subr.mxu0 0.0
    %997 = vmatpush2.msra.mxu0 0.0
    %998 = vmatprep.subr.mxu0 0.0
    %999 = vmatpush2.msra.mxu0 0.0
    %1000 = vmatprep.subr.mxu0 0.0
    %1001 = vmatpush2.msra.mxu0 0.0
    %1002 = vmatprep.subr.mxu0 0.0
    %1003 = vmatpush2.msra.mxu0 0.0
    %1004 = vmatprep.mubr.f32.mxu0 0.0
    %1005 = vmatmul.mubr.f32.gmra.mxu0 %v939
    %v1006 = vpop.f32.mrf.mxu0
    %v1007 = vadd.f32 %v209, %v1006
    %v1008 = vpop.f32.mrf.mxu0
    %v1009 = vadd.f32 %v211, %v1008
    %1010 = vdwg.mxu0
    %1011 = vmatprep.subr.mxu0 %v419
    %1012 = vmatpush1.msra.mxu0 %v418
    %1013 = vmatprep.subr.mxu0 %v415
    %1014 = vmatpush1.msra.mxu0 %v414
    %1015 = vmatprep.subr.mxu0 %v411
    %1016 = vmatpush1.msra.mxu0 %v410
    %1017 = vmatprep.subr.mxu0 %v407
    %1018 = vmatpush1.msra.mxu0 %v406
    %1019 = vmatprep.subr.mxu0 %v403
    %1020 = vmatpush1.msra.mxu0 %v402
    %1021 = vmatprep.subr.mxu0 %v399
    %1022 = vmatpush1.msra.mxu0 %v398
    %1023 = vmatprep.subr.mxu0 %v395
    %1024 = vmatpush1.msra.mxu0 %v394
    %1025 = vmatprep.subr.mxu0 %v391
    %1026 = vmatpush1.msra.mxu0 %v390
    %1027 = vmatprep.subr.mxu0 %v387
    %1028 = vmatpush1.msra.mxu0 %v386
    %1029 = vmatprep.subr.mxu0 %v383
    %1030 = vmatpush1.msra.mxu0 %v382
    %1031 = vmatprep.subr.mxu0 %v379
    %1032 = vmatpush1.msra.mxu0 %v378
    %1033 = vmatprep.subr.mxu0 %v375
    %1034 = vmatpush1.msra.mxu0 %v374
    %1035 = vmatprep.subr.mxu0 %v371
    %1036 = vmatpush1.msra.mxu0 %v370
    %1037 = vmatprep.subr.mxu0 %v367
    %1038 = vmatpush1.msra.mxu0 %v366
    %1039 = vmatprep.subr.mxu0 %v363
    %1040 = vmatpush1.msra.mxu0 %v362
    %1041 = vmatprep.subr.mxu0 %v359
    %1042 = vmatpush1.msra.mxu0 %v358
    %1043 = vmatprep.subr.mxu0 0.0
    %1044 = vmatpush2.msra.mxu0 0.0
    %1045 = vmatprep.subr.mxu0 0.0
    %1046 = vmatpush2.msra.mxu0 0.0
    %1047 = vmatprep.subr.mxu0 0.0
    %1048 = vmatpush2.msra.mxu0 0.0
    %1049 = vmatprep.subr.mxu0 0.0
    %1050 = vmatpush2.msra.mxu0 0.0
    %1051 = vmatprep.subr.mxu0 0.0
    %1052 = vmatpush2.msra.mxu0 0.0
    %1053 = vmatprep.subr.mxu0 0.0
    %1054 = vmatpush2.msra.mxu0 0.0
    %1055 = vmatprep.subr.mxu0 0.0
    %1056 = vmatpush2.msra.mxu0 0.0
    %1057 = vmatprep.subr.mxu0 0.0
    %1058 = vmatpush2.msra.mxu0 0.0
    %1059 = vmatprep.subr.mxu0 0.0
    %1060 = vmatpush2.msra.mxu0 0.0
    %1061 = vmatprep.subr.mxu0 0.0
    %1062 = vmatpush2.msra.mxu0 0.0
    %1063 = vmatprep.subr.mxu0 0.0
    %1064 = vmatpush2.msra.mxu0 0.0
    %1065 = vmatprep.subr.mxu0 0.0
    %1066 = vmatpush2.msra.mxu0 0.0
    %1067 = vmatprep.subr.mxu0 0.0
    %1068 = vmatpush2.msra.mxu0 0.0
    %1069 = vmatprep.subr.mxu0 0.0
    %1070 = vmatpush2.msra.mxu0 0.0
    %1071 = vmatprep.subr.mxu0 0.0
    %1072 = vmatpush2.msra.mxu0 0.0
    %1073 = vmatprep.subr.mxu0 0.0
    %1074 = vmatpush2.msra.mxu0 0.0
    %1075 = vmatprep.mubr.f32.mxu0 0.0
    %1076 = vmatmul.mubr.f32.gmra.mxu0 %v939
    %v1077 = vpop.f32.mrf.mxu0
    %v1078 = vadd.f32 %v328, %v1077
    %v1079 = vpop.f32.mrf.mxu0
    %v1080 = vadd.f32 %v330, %v1079
    %1081 = vdwg.mxu0
    %v1082 = vxor.u32 %v1007, 2147483648
    %v1083 = vxor.u32 %v1009, 2147483648
    %v1084 = vxor.u32 %v1078, 2147483648
    %v1085 = vmul.f32 %v1082, 1.442695
    %v1086 = vpow.pop %v1085
    %v1087 = vmul.f32 %v1083, 1.442695
    %v1088 = vpow.pop %v1087
    %v1089 = vmul.f32 %v1084, 1.442695
    %v1090 = vpow.pop %v1089
    %v1091 = vadd.f32 %v1086, 1.0
    %v1092 = vadd.f32 %v1088, 1.0
    %v1093 = vadd.f32 %v1090, 1.0
    %v1094 = vrcp.pop %v1091
    %v1095 = vmul.f32 1.0, %v1094
    %v1096 = vrcp.pop %v1092
    %v1097 = vmul.f32 1.0, %v1096
    %v1098 = vrcp.pop %v1093
    %v1099 = vmul.f32 1.0, %v1098
    %v1100 = vtanh.pop %v1080
    %v1101 = vmul.f32 %v1097, %v937
    %v1102 = vmul.f32 %v1095, %v1100
    %v1103 = vadd.f32 %v1101, %v1102
    %v1104 = vtanh.pop %v1103
    %v1105 = vmul.f32 %v1099, %v1104
    %1106 = vmatprep.subr.mxu0 %v417
    %1107 = vmatpush1.msra.mxu0 %v416
    %1108 = vmatprep.subr.mxu0 %v413
    %1109 = vmatpush1.msra.mxu0 %v412
    %1110 = vmatprep.subr.mxu0 %v409
    %1111 = vmatpush1.msra.mxu0 %v408
    %1112 = vmatprep.subr.mxu0 %v405
    %1113 = vmatpush1.msra.mxu0 %v404
    %1114 = vmatprep.subr.mxu0 %v401
    %1115 = vmatpush1.msra.mxu0 %v400
    %1116 = vmatprep.subr.mxu0 %v397
    %1117 = vmatpush1.msra.mxu0 %v396
    %1118 = vmatprep.subr.mxu0 %v393
    %1119 = vmatpush1.msra.mxu0 %v392
    %1120 = vmatprep.subr.mxu0 %v389
    %1121 = vmatpush1.msra.mxu0 %v388
    %1122 = vmatprep.subr.mxu0 %v385
    %1123 = vmatpush1.msra.mxu0 %v384
    %1124 = vmatprep.subr.mxu0 %v381
    %1125 = vmatpush1.msra.mxu0 %v380
    %1126 = vmatprep.subr.mxu0 %v377
    %1127 = vmatpush1.msra.mxu0 %v376
    %1128 = vmatprep.subr.mxu0 %v373
    %1129 = vmatpush1.msra.mxu0 %v372
    %1130 = vmatprep.subr.mxu0 %v369
    %1131 = vmatpush1.msra.mxu0 %v368
    %1132 = vmatprep.subr.mxu0 %v365
    %1133 = vmatpush1.msra.mxu0 %v364
    %1134 = vmatprep.subr.mxu0 %v361
    %1135 = vmatpush1.msra.mxu0 %v360
    %1136 = vmatprep.subr.mxu0 %v357
    %1137 = vmatpush1.msra.mxu0 %v356
    %1138 = vmatprep.subr.mxu0 0.0
    %1139 = vmatpush2.msra.mxu0 0.0
    %1140 = vmatprep.subr.mxu0 0.0
    %1141 = vmatpush2.msra.mxu0 0.0
    %1142 = vmatprep.subr.mxu0 0.0
    %1143 = vmatpush2.msra.mxu0 0.0
    %1144 = vmatprep.subr.mxu0 0.0
    %1145 = vmatpush2.msra.mxu0 0.0
    %1146 = vmatprep.subr.mxu0 0.0
    %1147 = vmatpush2.msra.mxu0 0.0
    %1148 = vmatprep.subr.mxu0 0.0
    %1149 = vmatpush2.msra.mxu0 0.0
    %1150 = vmatprep.subr.mxu0 0.0
    %1151 = vmatpush2.msra.mxu0 0.0
    %1152 = vmatprep.subr.mxu0 0.0
    %1153 = vmatpush2.msra.mxu0 0.0
    %1154 = vmatprep.subr.mxu0 0.0
    %1155 = vmatpush2.msra.mxu0 0.0
    %1156 = vmatprep.subr.mxu0 0.0
    %1157 = vmatpush2.msra.mxu0 0.0
    %1158 = vmatprep.subr.mxu0 0.0
    %1159 = vmatpush2.msra.mxu0 0.0
    %1160 = vmatprep.subr.mxu0 0.0
    %1161 = vmatpush2.msra.mxu0 0.0
    %1162 = vmatprep.subr.mxu0 0.0
    %1163 = vmatpush2.msra.mxu0 0.0
    %1164 = vmatprep.subr.mxu0 0.0
    %1165 = vmatpush2.msra.mxu0 0.0
    %1166 = vmatprep.subr.mxu0 0.0
    %1167 = vmatpush2.msra.mxu0 0.0
    %1168 = vmatprep.subr.mxu0 0.0
    %1169 = vmatpush2.msra.mxu0 0.0
    %1170 = vmatprep.mubr.f32.mxu0 0.0
    %1171 = vmatmul.mubr.f32.gmra.mxu0 %v1105
    %v1172 = vpop.f32.mrf.mxu0
    %v1173 = vadd.f32 %v215, %v1172
    %v1174 = vpop.f32.mrf.mxu0
    %v1175 = vadd.f32 %v217, %v1174
    %1176 = vdwg.mxu0
    %1177 = vmatprep.subr.mxu0 %v419
    %1178 = vmatpush1.msra.mxu0 %v418
    %1179 = vmatprep.subr.mxu0 %v415
    %1180 = vmatpush1.msra.mxu0 %v414
    %1181 = vmatprep.subr.mxu0 %v411
    %1182 = vmatpush1.msra.mxu0 %v410
    %1183 = vmatprep.subr.mxu0 %v407
    %1184 = vmatpush1.msra.mxu0 %v406
    %1185 = vmatprep.subr.mxu0 %v403
    %1186 = vmatpush1.msra.mxu0 %v402
    %1187 = vmatprep.subr.mxu0 %v399
    %1188 = vmatpush1.msra.mxu0 %v398
    %1189 = vmatprep.subr.mxu0 %v395
    %1190 = vmatpush1.msra.mxu0 %v394
    %1191 = vmatprep.subr.mxu0 %v391
    %1192 = vmatpush1.msra.mxu0 %v390
    %1193 = vmatprep.subr.mxu0 %v387
    %1194 = vmatpush1.msra.mxu0 %v386
    %1195 = vmatprep.subr.mxu0 %v383
    %1196 = vmatpush1.msra.mxu0 %v382
    %1197 = vmatprep.subr.mxu0 %v379
    %1198 = vmatpush1.msra.mxu0 %v378
    %1199 = vmatprep.subr.mxu0 %v375
    %1200 = vmatpush1.msra.mxu0 %v374
    %1201 = vmatprep.subr.mxu0 %v371
    %1202 = vmatpush1.msra.mxu0 %v370
    %1203 = vmatprep.subr.mxu0 %v367
    %1204 = vmatpush1.msra.mxu0 %v366
    %1205 = vmatprep.subr.mxu0 %v363
    %1206 = vmatpush1.msra.mxu0 %v362
    %1207 = vmatprep.subr.mxu0 %v359
    %1208 = vmatpush1.msra.mxu0 %v358
    %1209 = vmatprep.subr.mxu0 0.0
    %1210 = vmatpush2.msra.mxu0 0.0
    %1211 = vmatprep.subr.mxu0 0.0
    %1212 = vmatpush2.msra.mxu0 0.0
    %1213 = vmatprep.subr.mxu0 0.0
    %1214 = vmatpush2.msra.mxu0 0.0
    %1215 = vmatprep.subr.mxu0 0.0
    %1216 = vmatpush2.msra.mxu0 0.0
    %1217 = vmatprep.subr.mxu0 0.0
    %1218 = vmatpush2.msra.mxu0 0.0
    %1219 = vmatprep.subr.mxu0 0.0
    %1220 = vmatpush2.msra.mxu0 0.0
    %1221 = vmatprep.subr.mxu0 0.0
    %1222 = vmatpush2.msra.mxu0 0.0
    %1223 = vmatprep.subr.mxu0 0.0
    %1224 = vmatpush2.msra.mxu0 0.0
    %1225 = vmatprep.subr.mxu0 0.0
    %1226 = vmatpush2.msra.mxu0 0.0
    %1227 = vmatprep.subr.mxu0 0.0
    %1228 = vmatpush2.msra.mxu0 0.0
    %1229 = vmatprep.subr.mxu0 0.0
    %1230 = vmatpush2.msra.mxu0 0.0
    %1231 = vmatprep.subr.mxu0 0.0
    %1232 = vmatpush2.msra.mxu0 0.0
    %1233 = vmatprep.subr.mxu0 0.0
    %1234 = vmatpush2.msra.mxu0 0.0
    %1235 = vmatprep.subr.mxu0 0.0
    %1236 = vmatpush2.msra.mxu0 0.0
    %1237 = vmatprep.subr.mxu0 0.0
    %1238 = vmatpush2.msra.mxu0 0.0
    %1239 = vmatprep.subr.mxu0 0.0
    %1240 = vmatpush2.msra.mxu0 0.0
    %1241 = vmatprep.mubr.f32.mxu0 0.0
    %1242 = vmatmul.mubr.f32.gmra.mxu0 %v1105
    %v1243 = vpop.f32.mrf.mxu0
    %v1244 = vadd.f32 %v334, %v1243
    %v1245 = vpop.f32.mrf.mxu0
    %v1246 = vadd.f32 %v336, %v1245
    %1247 = vdwg.mxu0
    %v1248 = vxor.u32 %v1173, 2147483648
    %v1249 = vxor.u32 %v1175, 2147483648
    %v1250 = vxor.u32 %v1244, 2147483648
    %v1251 = vmul.f32 %v1248, 1.442695
    %v1252 = vpow.pop %v1251
    %v1253 = vmul.f32 %v1249, 1.442695
    %v1254 = vpow.pop %v1253
    %v1255 = vmul.f32 %v1250, 1.442695
    %v1256 = vpow.pop %v1255
    %v1257 = vadd.f32 %v1252, 1.0
    %v1258 = vadd.f32 %v1254, 1.0
    %v1259 = vadd.f32 %v1256, 1.0
    %v1260 = vrcp.pop %v1257
    %v1261 = vmul.f32 1.0, %v1260
    %v1262 = vrcp.pop %v1258
    %v1263 = vmul.f32 1.0, %v1262
    %v1264 = vrcp.pop %v1259
    %v1265 = vmul.f32 1.0, %v1264
    %v1266 = vtanh.pop %v1246
    %v1267 = vmul.f32 %v1263, %v1103
    %v1268 = vmul.f32 %v1261, %v1266
    %v1269 = vadd.f32 %v1267, %v1268
    %v1270 = vtanh.pop %v1269
    %v1271 = vmul.f32 %v1265, %v1270
    %1272 = vmatprep.subr.mxu0 %v417
    %1273 = vmatpush1.msra.mxu0 %v416
    %1274 = vmatprep.subr.mxu0 %v413
    %1275 = vmatpush1.msra.mxu0 %v412
    %1276 = vmatprep.subr.mxu0 %v409
    %1277 = vmatpush1.msra.mxu0 %v408
    %1278 = vmatprep.subr.mxu0 %v405
    %1279 = vmatpush1.msra.mxu0 %v404
    %1280 = vmatprep.subr.mxu0 %v401
    %1281 = vmatpush1.msra.mxu0 %v400
    %1282 = vmatprep.subr.mxu0 %v397
    %1283 = vmatpush1.msra.mxu0 %v396
    %1284 = vmatprep.subr.mxu0 %v393
    %1285 = vmatpush1.msra.mxu0 %v392
    %1286 = vmatprep.subr.mxu0 %v389
    %1287 = vmatpush1.msra.mxu0 %v388
    %1288 = vmatprep.subr.mxu0 %v385
    %1289 = vmatpush1.msra.mxu0 %v384
    %1290 = vmatprep.subr.mxu0 %v381
    %1291 = vmatpush1.msra.mxu0 %v380
    %1292 = vmatprep.subr.mxu0 %v377
    %1293 = vmatpush1.msra.mxu0 %v376
    %1294 = vmatprep.subr.mxu0 %v373
    %1295 = vmatpush1.msra.mxu0 %v372
    %1296 = vmatprep.subr.mxu0 %v369
    %1297 = vmatpush1.msra.mxu0 %v368
    %1298 = vmatprep.subr.mxu0 %v365
    %1299 = vmatpush1.msra.mxu0 %v364
    %1300 = vmatprep.subr.mxu0 %v361
    %1301 = vmatpush1.msra.mxu0 %v360
    %1302 = vmatprep.subr.mxu0 %v357
    %1303 = vmatpush1.msra.mxu0 %v356
    %1304 = vmatprep.subr.mxu0 0.0
    %1305 = vmatpush2.msra.mxu0 0.0
    %1306 = vmatprep.subr.mxu0 0.0
    %1307 = vmatpush2.msra.mxu0 0.0
    %1308 = vmatprep.subr.mxu0 0.0
    %1309 = vmatpush2.msra.mxu0 0.0
    %1310 = vmatprep.subr.mxu0 0.0
    %1311 = vmatpush2.msra.mxu0 0.0
    %1312 = vmatprep.subr.mxu0 0.0
    %1313 = vmatpush2.msra.mxu0 0.0
    %1314 = vmatprep.subr.mxu0 0.0
    %1315 = vmatpush2.msra.mxu0 0.0
    %1316 = vmatprep.subr.mxu0 0.0
    %1317 = vmatpush2.msra.mxu0 0.0
    %1318 = vmatprep.subr.mxu0 0.0
    %1319 = vmatpush2.msra.mxu0 0.0
    %1320 = vmatprep.subr.mxu0 0.0
    %1321 = vmatpush2.msra.mxu0 0.0
    %1322 = vmatprep.subr.mxu0 0.0
    %1323 = vmatpush2.msra.mxu0 0.0
    %1324 = vmatprep.subr.mxu0 0.0
    %1325 = vmatpush2.msra.mxu0 0.0
    %1326 = vmatprep.subr.mxu0 0.0
    %1327 = vmatpush2.msra.mxu0 0.0
    %1328 = vmatprep.subr.mxu0 0.0
    %1329 = vmatpush2.msra.mxu0 0.0
    %1330 = vmatprep.subr.mxu0 0.0
    %1331 = vmatpush2.msra.mxu0 0.0
    %1332 = vmatprep.subr.mxu0 0.0
    %1333 = vmatpush2.msra.mxu0 0.0
    %1334 = vmatprep.subr.mxu0 0.0
    %1335 = vmatpush2.msra.mxu0 0.0
    %1336 = vmatprep.mubr.f32.mxu0 0.0
    %1337 = vmatmul.mubr.f32.gmra.mxu0 %v1271
    %v1338 = vpop.f32.mrf.mxu0
    %v1339 = vadd.f32 %v221, %v1338
    %v1340 = vpop.f32.mrf.mxu0
    %v1341 = vadd.f32 %v223, %v1340
    %1342 = vdwg.mxu0
    %1343 = vmatprep.subr.mxu0 %v419
    %1344 = vmatpush1.msra.mxu0 %v418
    %1345 = vmatprep.subr.mxu0 %v415
    %1346 = vmatpush1.msra.mxu0 %v414
    %1347 = vmatprep.subr.mxu0 %v411
    %1348 = vmatpush1.msra.mxu0 %v410
    %1349 = vmatprep.subr.mxu0 %v407
    %1350 = vmatpush1.msra.mxu0 %v406
    %1351 = vmatprep.subr.mxu0 %v403
    %1352 = vmatpush1.msra.mxu0 %v402
    %1353 = vmatprep.subr.mxu0 %v399
    %1354 = vmatpush1.msra.mxu0 %v398
    %1355 = vmatprep.subr.mxu0 %v395
    %1356 = vmatpush1.msra.mxu0 %v394
    %1357 = vmatprep.subr.mxu0 %v391
    %1358 = vmatpush1.msra.mxu0 %v390
    %1359 = vmatprep.subr.mxu0 %v387
    %1360 = vmatpush1.msra.mxu0 %v386
    %1361 = vmatprep.subr.mxu0 %v383
    %1362 = vmatpush1.msra.mxu0 %v382
    %1363 = vmatprep.subr.mxu0 %v379
    %1364 = vmatpush1.msra.mxu0 %v378
    %1365 = vmatprep.subr.mxu0 %v375
    %1366 = vmatpush1.msra.mxu0 %v374
    %1367 = vmatprep.subr.mxu0 %v371
    %1368 = vmatpush1.msra.mxu0 %v370
    %1369 = vmatprep.subr.mxu0 %v367
    %1370 = vmatpush1.msra.mxu0 %v366
    %1371 = vmatprep.subr.mxu0 %v363
    %1372 = vmatpush1.msra.mxu0 %v362
    %1373 = vmatprep.subr.mxu0 %v359
    %1374 = vmatpush1.msra.mxu0 %v358
    %1375 = vmatprep.subr.mxu0 0.0
    %1376 = vmatpush2.msra.mxu0 0.0
    %1377 = vmatprep.subr.mxu0 0.0
    %1378 = vmatpush2.msra.mxu0 0.0
    %1379 = vmatprep.subr.mxu0 0.0
    %1380 = vmatpush2.msra.mxu0 0.0
    %1381 = vmatprep.subr.mxu0 0.0
    %1382 = vmatpush2.msra.mxu0 0.0
    %1383 = vmatprep.subr.mxu0 0.0
    %1384 = vmatpush2.msra.mxu0 0.0
    %1385 = vmatprep.subr.mxu0 0.0
    %1386 = vmatpush2.msra.mxu0 0.0
    %1387 = vmatprep.subr.mxu0 0.0
    %1388 = vmatpush2.msra.mxu0 0.0
    %1389 = vmatprep.subr.mxu0 0.0
    %1390 = vmatpush2.msra.mxu0 0.0
    %1391 = vmatprep.subr.mxu0 0.0
    %1392 = vmatpush2.msra.mxu0 0.0
    %1393 = vmatprep.subr.mxu0 0.0
    %1394 = vmatpush2.msra.mxu0 0.0
    %1395 = vmatprep.subr.mxu0 0.0
    %1396 = vmatpush2.msra.mxu0 0.0
    %1397 = vmatprep.subr.mxu0 0.0
    %1398 = vmatpush2.msra.mxu0 0.0
    %1399 = vmatprep.subr.mxu0 0.0
    %1400 = vmatpush2.msra.mxu0 0.0
    %1401 = vmatprep.subr.mxu0 0.0
    %1402 = vmatpush2.msra.mxu0 0.0
    %1403 = vmatprep.subr.mxu0 0.0
    %1404 = vmatpush2.msra.mxu0 0.0
    %1405 = vmatprep.subr.mxu0 0.0
    %1406 = vmatpush2.msra.mxu0 0.0
    %1407 = vmatprep.mubr.f32.mxu0 0.0
    %1408 = vmatmul.mubr.f32.gmra.mxu0 %v1271
    %v1409 = vpop.f32.mrf.mxu0
    %v1410 = vadd.f32 %v340, %v1409
    %v1411 = vpop.f32.mrf.mxu0
    %v1412 = vadd.f32 %v342, %v1411
    %1413 = vdwg.mxu0
    %v1414 = vxor.u32 %v1339, 2147483648
    %v1415 = vxor.u32 %v1341, 2147483648
    %v1416 = vxor.u32 %v1410, 2147483648
    %v1417 = vmul.f32 %v1414, 1.442695
    %v1418 = vpow.pop %v1417
    %v1419 = vmul.f32 %v1415, 1.442695
    %v1420 = vpow.pop %v1419
    %v1421 = vmul.f32 %v1416, 1.442695
    %v1422 = vpow.pop %v1421
    %v1423 = vadd.f32 %v1418, 1.0
    %v1424 = vadd.f32 %v1420, 1.0
    %v1425 = vadd.f32 %v1422, 1.0
    %v1426 = vrcp.pop %v1423
    %v1427 = vmul.f32 1.0, %v1426
    %v1428 = vrcp.pop %v1424
    %v1429 = vmul.f32 1.0, %v1428
    %v1430 = vrcp.pop %v1425
    %v1431 = vmul.f32 1.0, %v1430
    %v1432 = vtanh.pop %v1412
    %v1433 = vmul.f32 %v1429, %v1269
    %v1434 = vmul.f32 %v1427, %v1432
    %v1435 = vadd.f32 %v1433, %v1434
    %v1436 = vtanh.pop %v1435
    %v1437 = vmul.f32 %v1431, %v1436
    %1438 = vmatprep.subr.mxu0 %v417
    %1439 = vmatpush1.msra.mxu0 %v416
    %1440 = vmatprep.subr.mxu0 %v413
    %1441 = vmatpush1.msra.mxu0 %v412
    %1442 = vmatprep.subr.mxu0 %v409
    %1443 = vmatpush1.msra.mxu0 %v408
    %1444 = vmatprep.subr.mxu0 %v405
    %1445 = vmatpush1.msra.mxu0 %v404
    %1446 = vmatprep.subr.mxu0 %v401
    %1447 = vmatpush1.msra.mxu0 %v400
    %1448 = vmatprep.subr.mxu0 %v397
    %1449 = vmatpush1.msra.mxu0 %v396
    %1450 = vmatprep.subr.mxu0 %v393
    %1451 = vmatpush1.msra.mxu0 %v392
    %1452 = vmatprep.subr.mxu0 %v389
    %1453 = vmatpush1.msra.mxu0 %v388
    %1454 = vmatprep.subr.mxu0 %v385
    %1455 = vmatpush1.msra.mxu0 %v384
    %1456 = vmatprep.subr.mxu0 %v381
    %1457 = vmatpush1.msra.mxu0 %v380
    %1458 = vmatprep.subr.mxu0 %v377
    %1459 = vmatpush1.msra.mxu0 %v376
    %1460 = vmatprep.subr.mxu0 %v373
    %1461 = vmatpush1.msra.mxu0 %v372
    %1462 = vmatprep.subr.mxu0 %v369
    %1463 = vmatpush1.msra.mxu0 %v368
    %1464 = vmatprep.subr.mxu0 %v365
    %1465 = vmatpush1.msra.mxu0 %v364
    %1466 = vmatprep.subr.mxu0 %v361
    %1467 = vmatpush1.msra.mxu0 %v360
    %1468 = vmatprep.subr.mxu0 %v357
    %1469 = vmatpush1.msra.mxu0 %v356
    %1470 = vmatprep.subr.mxu0 0.0
    %1471 = vmatpush2.msra.mxu0 0.0
    %1472 = vmatprep.subr.mxu0 0.0
    %1473 = vmatpush2.msra.mxu0 0.0
    %1474 = vmatprep.subr.mxu0 0.0
    %1475 = vmatpush2.msra.mxu0 0.0
    %1476 = vmatprep.subr.mxu0 0.0
    %1477 = vmatpush2.msra.mxu0 0.0
    %1478 = vmatprep.subr.mxu0 0.0
    %1479 = vmatpush2.msra.mxu0 0.0
    %1480 = vmatprep.subr.mxu0 0.0
    %1481 = vmatpush2.msra.mxu0 0.0
    %1482 = vmatprep.subr.mxu0 0.0
    %1483 = vmatpush2.msra.mxu0 0.0
    %1484 = vmatprep.subr.mxu0 0.0
    %1485 = vmatpush2.msra.mxu0 0.0
    %1486 = vmatprep.subr.mxu0 0.0
    %1487 = vmatpush2.msra.mxu0 0.0
    %1488 = vmatprep.subr.mxu0 0.0
    %1489 = vmatpush2.msra.mxu0 0.0
    %1490 = vmatprep.subr.mxu0 0.0
    %1491 = vmatpush2.msra.mxu0 0.0
    %1492 = vmatprep.subr.mxu0 0.0
    %1493 = vmatpush2.msra.mxu0 0.0
    %1494 = vmatprep.subr.mxu0 0.0
    %1495 = vmatpush2.msra.mxu0 0.0
    %1496 = vmatprep.subr.mxu0 0.0
    %1497 = vmatpush2.msra.mxu0 0.0
    %1498 = vmatprep.subr.mxu0 0.0
    %1499 = vmatpush2.msra.mxu0 0.0
    %1500 = vmatprep.subr.mxu0 0.0
    %1501 = vmatpush2.msra.mxu0 0.0
    %1502 = vmatprep.mubr.f32.mxu0 0.0
    %1503 = vmatmul.mubr.f32.gmra.mxu0 %v1437
    %v1504 = vpop.f32.mrf.mxu0
    %v1505 = vadd.f32 %v227, %v1504
    %v1506 = vpop.f32.mrf.mxu0
    %v1507 = vadd.f32 %v229, %v1506
    %1508 = vdwg.mxu0
    %1509 = vmatprep.subr.mxu0 %v419
    %1510 = vmatpush1.msra.mxu0 %v418
    %1511 = vmatprep.subr.mxu0 %v415
    %1512 = vmatpush1.msra.mxu0 %v414
    %1513 = vmatprep.subr.mxu0 %v411
    %1514 = vmatpush1.msra.mxu0 %v410
    %1515 = vmatprep.subr.mxu0 %v407
    %1516 = vmatpush1.msra.mxu0 %v406
    %1517 = vmatprep.subr.mxu0 %v403
    %1518 = vmatpush1.msra.mxu0 %v402
    %1519 = vmatprep.subr.mxu0 %v399
    %1520 = vmatpush1.msra.mxu0 %v398
    %1521 = vmatprep.subr.mxu0 %v395
    %1522 = vmatpush1.msra.mxu0 %v394
    %1523 = vmatprep.subr.mxu0 %v391
    %1524 = vmatpush1.msra.mxu0 %v390
    %1525 = vmatprep.subr.mxu0 %v387
    %1526 = vmatpush1.msra.mxu0 %v386
    %1527 = vmatprep.subr.mxu0 %v383
    %1528 = vmatpush1.msra.mxu0 %v382
    %1529 = vmatprep.subr.mxu0 %v379
    %1530 = vmatpush1.msra.mxu0 %v378
    %1531 = vmatprep.subr.mxu0 %v375
    %1532 = vmatpush1.msra.mxu0 %v374
    %1533 = vmatprep.subr.mxu0 %v371
    %1534 = vmatpush1.msra.mxu0 %v370
    %1535 = vmatprep.subr.mxu0 %v367
    %1536 = vmatpush1.msra.mxu0 %v366
    %1537 = vmatprep.subr.mxu0 %v363
    %1538 = vmatpush1.msra.mxu0 %v362
    %1539 = vmatprep.subr.mxu0 %v359
    %1540 = vmatpush1.msra.mxu0 %v358
    %1541 = vmatprep.subr.mxu0 0.0
    %1542 = vmatpush2.msra.mxu0 0.0
    %1543 = vmatprep.subr.mxu0 0.0
    %1544 = vmatpush2.msra.mxu0 0.0
    %1545 = vmatprep.subr.mxu0 0.0
    %1546 = vmatpush2.msra.mxu0 0.0
    %1547 = vmatprep.subr.mxu0 0.0
    %1548 = vmatpush2.msra.mxu0 0.0
    %1549 = vmatprep.subr.mxu0 0.0
    %1550 = vmatpush2.msra.mxu0 0.0
    %1551 = vmatprep.subr.mxu0 0.0
    %1552 = vmatpush2.msra.mxu0 0.0
    %1553 = vmatprep.subr.mxu0 0.0
    %1554 = vmatpush2.msra.mxu0 0.0
    %1555 = vmatprep.subr.mxu0 0.0
    %1556 = vmatpush2.msra.mxu0 0.0
    %1557 = vmatprep.subr.mxu0 0.0
    %1558 = vmatpush2.msra.mxu0 0.0
    %1559 = vmatprep.subr.mxu0 0.0
    %1560 = vmatpush2.msra.mxu0 0.0
    %1561 = vmatprep.subr.mxu0 0.0
    %1562 = vmatpush2.msra.mxu0 0.0
    %1563 = vmatprep.subr.mxu0 0.0
    %1564 = vmatpush2.msra.mxu0 0.0
    %1565 = vmatprep.subr.mxu0 0.0
    %1566 = vmatpush2.msra.mxu0 0.0
    %1567 = vmatprep.subr.mxu0 0.0
    %1568 = vmatpush2.msra.mxu0 0.0
    %1569 = vmatprep.subr.mxu0 0.0
    %1570 = vmatpush2.msra.mxu0 0.0
    %1571 = vmatprep.subr.mxu0 0.0
    %1572 = vmatpush2.msra.mxu0 0.0
    %1573 = vmatprep.mubr.f32.mxu0 0.0
    %1574 = vmatmul.mubr.f32.gmra.mxu0 %v1437
    %v1575 = vpop.f32.mrf.mxu0
    %v1576 = vadd.f32 %v346, %v1575
    %v1577 = vpop.f32.mrf.mxu0
    %v1578 = vadd.f32 %v348, %v1577
    %1579 = vdwg.mxu0
    %v1580 = vxor.u32 %v1505, 2147483648
    %v1581 = vxor.u32 %v1507, 2147483648
    %v1582 = vxor.u32 %v1576, 2147483648
    %v1583 = vmul.f32 %v1580, 1.442695
    %v1584 = vpow.pop %v1583
    %v1585 = vmul.f32 %v1581, 1.442695
    %v1586 = vpow.pop %v1585
    %v1587 = vmul.f32 %v1582, 1.442695
    %v1588 = vpow.pop %v1587
    %v1589 = vadd.f32 %v1584, 1.0
    %v1590 = vadd.f32 %v1586, 1.0
    %v1591 = vadd.f32 %v1588, 1.0
    %v1592 = vrcp.pop %v1589
    %v1593 = vmul.f32 1.0, %v1592
    %v1594 = vrcp.pop %v1590
    %v1595 = vmul.f32 1.0, %v1594
    %v1596 = vrcp.pop %v1591
    %v1597 = vmul.f32 1.0, %v1596
    %v1598 = vtanh.pop %v1578
    %v1599 = vmul.f32 %v1595, %v1435
    %v1600 = vmul.f32 %v1593, %v1598
    %v1601 = vadd.f32 %v1599, %v1600
    %v1602 = vtanh.pop %v1601
    %v1603 = vmul.f32 %v1597, %v1602
    %1604 = vmatprep.subr.mxu0 %v417
    %1605 = vmatpush1.msra.mxu0 %v416
    %1606 = vmatprep.subr.mxu0 %v413
    %1607 = vmatpush1.msra.mxu0 %v412
    %1608 = vmatprep.subr.mxu0 %v409
    %1609 = vmatpush1.msra.mxu0 %v408
    %1610 = vmatprep.subr.mxu0 %v405
    %1611 = vmatpush1.msra.mxu0 %v404
    %1612 = vmatprep.subr.mxu0 %v401
    %1613 = vmatpush1.msra.mxu0 %v400
    %1614 = vmatprep.subr.mxu0 %v397
    %1615 = vmatpush1.msra.mxu0 %v396
    %1616 = vmatprep.subr.mxu0 %v393
    %1617 = vmatpush1.msra.mxu0 %v392
    %1618 = vmatprep.subr.mxu0 %v389
    %1619 = vmatpush1.msra.mxu0 %v388
    %1620 = vmatprep.subr.mxu0 %v385
    %1621 = vmatpush1.msra.mxu0 %v384
    %1622 = vmatprep.subr.mxu0 %v381
    %1623 = vmatpush1.msra.mxu0 %v380
    %1624 = vmatprep.subr.mxu0 %v377
    %1625 = vmatpush1.msra.mxu0 %v376
    %1626 = vmatprep.subr.mxu0 %v373
    %1627 = vmatpush1.msra.mxu0 %v372
    %1628 = vmatprep.subr.mxu0 %v369
    %1629 = vmatpush1.msra.mxu0 %v368
    %1630 = vmatprep.subr.mxu0 %v365
    %1631 = vmatpush1.msra.mxu0 %v364
    %1632 = vmatprep.subr.mxu0 %v361
    %1633 = vmatpush1.msra.mxu0 %v360
    %1634 = vmatprep.subr.mxu0 %v357
    %1635 = vmatpush1.msra.mxu0 %v356
    %1636 = vmatprep.subr.mxu0 0.0
    %1637 = vmatpush2.msra.mxu0 0.0
    %1638 = vmatprep.subr.mxu0 0.0
    %1639 = vmatpush2.msra.mxu0 0.0
    %1640 = vmatprep.subr.mxu0 0.0
    %1641 = vmatpush2.msra.mxu0 0.0
    %1642 = vmatprep.subr.mxu0 0.0
    %1643 = vmatpush2.msra.mxu0 0.0
    %1644 = vmatprep.subr.mxu0 0.0
    %1645 = vmatpush2.msra.mxu0 0.0
    %1646 = vmatprep.subr.mxu0 0.0
    %1647 = vmatpush2.msra.mxu0 0.0
    %1648 = vmatprep.subr.mxu0 0.0
    %1649 = vmatpush2.msra.mxu0 0.0
    %1650 = vmatprep.subr.mxu0 0.0
    %1651 = vmatpush2.msra.mxu0 0.0
    %1652 = vmatprep.subr.mxu0 0.0
    %1653 = vmatpush2.msra.mxu0 0.0
    %1654 = vmatprep.subr.mxu0 0.0
    %1655 = vmatpush2.msra.mxu0 0.0
    %1656 = vmatprep.subr.mxu0 0.0
    %1657 = vmatpush2.msra.mxu0 0.0
    %1658 = vmatprep.subr.mxu0 0.0
    %1659 = vmatpush2.msra.mxu0 0.0
    %1660 = vmatprep.subr.mxu0 0.0
    %1661 = vmatpush2.msra.mxu0 0.0
    %1662 = vmatprep.subr.mxu0 0.0
    %1663 = vmatpush2.msra.mxu0 0.0
    %1664 = vmatprep.subr.mxu0 0.0
    %1665 = vmatpush2.msra.mxu0 0.0
    %1666 = vmatprep.subr.mxu0 0.0
    %1667 = vmatpush2.msra.mxu0 0.0
    %1668 = vmatprep.mubr.f32.mxu0 0.0
    %1669 = vmatmul.mubr.f32.gmra.mxu0 %v1603
    %v1670 = vpop.f32.mrf.mxu0
    %v1671 = vadd.f32 %v233, %v1670
    %v1672 = vpop.f32.mrf.mxu0
    %v1673 = vadd.f32 %v235, %v1672
    %1674 = vdwg.mxu0
    %1675 = vmatprep.subr.mxu0 %v419
    %1676 = vmatpush1.msra.mxu0 %v418
    %1677 = vmatprep.subr.mxu0 %v415
    %1678 = vmatpush1.msra.mxu0 %v414
    %1679 = vmatprep.subr.mxu0 %v411
    %1680 = vmatpush1.msra.mxu0 %v410
    %1681 = vmatprep.subr.mxu0 %v407
    %1682 = vmatpush1.msra.mxu0 %v406
    %1683 = vmatprep.subr.mxu0 %v403
    %1684 = vmatpush1.msra.mxu0 %v402
    %1685 = vmatprep.subr.mxu0 %v399
    %1686 = vmatpush1.msra.mxu0 %v398
    %1687 = vmatprep.subr.mxu0 %v395
    %1688 = vmatpush1.msra.mxu0 %v394
    %1689 = vmatprep.subr.mxu0 %v391
    %1690 = vmatpush1.msra.mxu0 %v390
    %1691 = vmatprep.subr.mxu0 %v387
    %1692 = vmatpush1.msra.mxu0 %v386
    %1693 = vmatprep.subr.mxu0 %v383
    %1694 = vmatpush1.msra.mxu0 %v382
    %1695 = vmatprep.subr.mxu0 %v379
    %1696 = vmatpush1.msra.mxu0 %v378
    %1697 = vmatprep.subr.mxu0 %v375
    %1698 = vmatpush1.msra.mxu0 %v374
    %1699 = vmatprep.subr.mxu0 %v371
    %1700 = vmatpush1.msra.mxu0 %v370
    %1701 = vmatprep.subr.mxu0 %v367
    %1702 = vmatpush1.msra.mxu0 %v366
    %1703 = vmatprep.subr.mxu0 %v363
    %1704 = vmatpush1.msra.mxu0 %v362
    %1705 = vmatprep.subr.mxu0 %v359
    %1706 = vmatpush1.msra.mxu0 %v358
    %1707 = vmatprep.subr.mxu0 0.0
    %1708 = vmatpush2.msra.mxu0 0.0
    %1709 = vmatprep.subr.mxu0 0.0
    %1710 = vmatpush2.msra.mxu0 0.0
    %1711 = vmatprep.subr.mxu0 0.0
    %1712 = vmatpush2.msra.mxu0 0.0
    %1713 = vmatprep.subr.mxu0 0.0
    %1714 = vmatpush2.msra.mxu0 0.0
    %1715 = vmatprep.subr.mxu0 0.0
    %1716 = vmatpush2.msra.mxu0 0.0
    %1717 = vmatprep.subr.mxu0 0.0
    %1718 = vmatpush2.msra.mxu0 0.0
    %1719 = vmatprep.subr.mxu0 0.0
    %1720 = vmatpush2.msra.mxu0 0.0
    %1721 = vmatprep.subr.mxu0 0.0
    %1722 = vmatpush2.msra.mxu0 0.0
    %1723 = vmatprep.subr.mxu0 0.0
    %1724 = vmatpush2.msra.mxu0 0.0
    %1725 = vmatprep.subr.mxu0 0.0
    %1726 = vmatpush2.msra.mxu0 0.0
    %1727 = vmatprep.subr.mxu0 0.0
    %1728 = vmatpush2.msra.mxu0 0.0
    %1729 = vmatprep.subr.mxu0 0.0
    %1730 = vmatpush2.msra.mxu0 0.0
    %1731 = vmatprep.subr.mxu0 0.0
    %1732 = vmatpush2.msra.mxu0 0.0
    %1733 = vmatprep.subr.mxu0 0.0
    %1734 = vmatpush2.msra.mxu0 0.0
    %1735 = vmatprep.subr.mxu0 0.0
    %1736 = vmatpush2.msra.mxu0 0.0
    %1737 = vmatprep.subr.mxu0 0.0
    %1738 = vmatpush2.msra.mxu0 0.0
    %1739 = vmatprep.mubr.f32.mxu0 0.0
    %1740 = vmatmul.mubr.f32.gmra.mxu0 %v1603
    %v1741 = vpop.f32.mrf.mxu0
    %v1742 = vadd.f32 %v352, %v1741
    %v1743 = vpop.f32.mrf.mxu0
    %v1744 = vadd.f32 %v354, %v1743
    %1745 = vdwg.mxu0
    %v1746 = vxor.u32 %v1671, 2147483648
    %v1747 = vxor.u32 %v1673, 2147483648
    %v1748 = vxor.u32 %v1742, 2147483648
    %v1749 = vmul.f32 %v1746, 1.442695
    %v1750 = vpow.pop %v1749
    %v1751 = vmul.f32 %v1747, 1.442695
    %v1752 = vpow.pop %v1751
    %v1753 = vmul.f32 %v1748, 1.442695
    %v1754 = vpow.pop %v1753
    %v1755 = vadd.f32 %v1750, 1.0
    %v1756 = vadd.f32 %v1752, 1.0
    %v1757 = vadd.f32 %v1754, 1.0
    %v1758 = vrcp.pop %v1755
    %v1759 = vmul.f32 1.0, %v1758
    %v1760 = vrcp.pop %v1756
    %v1761 = vmul.f32 1.0, %v1760
    %v1762 = vrcp.pop %v1757
    %v1763 = vmul.f32 1.0, %v1762
    %v1764 = vtanh.pop %v1744
    %v1765 = vmul.f32 %v1761, %v1601
    %v1766 = vmul.f32 %v1759, %v1764
    %v1767 = vadd.f32 %v1765, %v1766
    %v1768 = vtanh.pop %v1767
    %v1769 = vmul.f32 %v1763, %v1768
    %v1770 = vld [vmem:[%s4] sm:$0x1]
    %v1772 = vlaneseq
    %v1773 = vshrl.u32 %v1772, 7
    %v1774 = vsub.s32 0, %v1773
    %v1775 = vrot.slane %v1770, %v1774
    %v1777 = vmul.f32 %v1769, %v1775
    %1778 = vadd.xlane.f32.xlu0 %v1777
    %v1779 = vpop.xlane.xlu0 %1778
    %v1780 = vld [vmem:[#allocation2] sm:$0x1]
    %v1782 = vlaneseq
    %v1783 = vshrl.u32 %v1782, 7
    %v1784 = vsub.s32 0, %v1783
    %v1785 = vrot.slane %v1780, %v1784
    %v1787 = vadd.f32 %v1779, %v1785
    %v1788 = vxor.u32 %v1787, 2147483648
    %v1789 = vmul.f32 %v1788, 1.442695
    %v1790 = vpow.pop %v1789
    %v1791 = vadd.f32 %v1790, 1.0
    %v1792 = vrcp.pop %v1791
    %v1793 = vmul.f32 1.0, %v1792
    %vm1794 = vcmask 7168
    %1795 = vst.msk [vmem:[%s6] sm:$0xff] %vm1794, %v1793
    // Predicated region
    $region30: #{tpu_custom_call.1} parent=1 // pred_check
      _
    $region31: #{tpu_custom_call.1} parent=1 // pred_check_branch
      %1797 = sbr.rel (0) target = $region33
    $region32: #{tpu_custom_call.1} parent=1 // pred_region
      _
    $region33: #{tpu_custom_call.1} parent=1 // pred_fallthru
      _
    // Predicated region
    $region34: #{tpu_custom_call.1} parent=1 // pred_check
      _
    $region35: #{tpu_custom_call.1} parent=1 // pred_check_branch
      %1799 = sbr.rel (0) target = $region37
    $region36: #{tpu_custom_call.1} parent=1 // pred_region
      _
    $region37: #{tpu_custom_call.1} parent=1 // pred_fallthru
      _
    %1800 = vsyncpa [#allocation4], 1

</llo_original>
